<compile_context>
chip_gen: v5e
topology: v5e:2x2
jax: 0.10.0
libtpu: 0.0.40
codegen_flags: <defaults>
</compile_context>

<pallas_src>
import functools

import jax
import jax.numpy as jnp
from jax.experimental import pallas as pl
from jax.experimental.pallas import tpu as pltpu


def _self_attention_kernel(x_ref, wq_ref, wk_ref, wv_ref, wout_ref, bout_ref,
                           out_ref, attn_ref, k_scr, v_scr,
                           *, heads, dim_head, tq):
    """One grid step = one (batch, query-tile) pair.

    x_ref    : (1, N, dim)           VMEM  full sequence (resident across qi)
    wq_ref   : (dim, inner)          VMEM  pre-transposed, pre-scaled q weight
    wk_ref   : (dim, inner)          VMEM  pre-transposed k weight
    wv_ref   : (dim, inner)          VMEM  pre-transposed v weight
    wout_ref : (inner, dim)          VMEM  pre-transposed output weight
    bout_ref : (1, dim)              VMEM  output bias (f32)
    out_ref  : (1, tq, dim)          VMEM
    attn_ref : (1, heads, tq, N)     VMEM
    k_scr    : (heads, N, dim_head)  VMEM scratch, carried across the qi axis
    v_scr    : (heads, N, dim_head)  VMEM scratch, carried across the qi axis
    """
    inner = heads * dim_head
    qi = pl.program_id(1)
    n_kv = x_ref.shape[1]
    cdtype = k_scr.dtype

    # K/V projection + head-split relayout ONCE per batch (qi == 0).  The qi
    # grid axis is declared "arbitrary" (sequential), so the scratch carry
    # across query tiles is valid.
    @pl.when(qi == 0)
    def _():
        x_all = x_ref[0]                                                # (N, dim)
        k = jnp.dot(x_all, wk_ref[...], preferred_element_type=jnp.float32)
        v = jnp.dot(x_all, wv_ref[...], preferred_element_type=jnp.float32)
        k = k.astype(cdtype).reshape(n_kv, heads, dim_head)
        v = v.astype(cdtype).reshape(n_kv, heads, dim_head)
        k_scr[...] = jnp.transpose(k, (1, 0, 2))                        # (h, N, d)
        v_scr[...] = jnp.transpose(v, (1, 0, 2))                        # (h, N, d)

    # Query rows of this tile, sliced out of the resident full-sequence block
    # (no duplicated x HBM stream).
    row0 = pl.multiple_of(qi * tq, tq)
    xq = x_ref[0, pl.ds(row0, tq), :]                                   # (tq, dim)

    # Q projection; softmax scale is already folded into wq in the wrapper.
    q = jnp.dot(xq, wq_ref[...], preferred_element_type=jnp.float32)    # (tq, inner)
    qh = q.astype(cdtype).reshape(tq, heads, dim_head)

    kh = k_scr[...]                                                     # (h, N, d)
    vh = v_scr[...]                                                     # (h, N, d)

    # All heads in one batched contraction -> (heads, tq, N) scores, f32.
    s = jnp.einsum('qhd,hkd->hqk', qh, kh, preferred_element_type=jnp.float32)

    # Numerically stable softmax along keys; reciprocal on the EUP slot.
    m = jnp.max(s, axis=-1, keepdims=True)
    e = jnp.exp(s - m)
    l = jnp.sum(e, axis=-1, keepdims=True)
    p = e * pl.reciprocal(l, approx=True)

    attn_ref[0] = p.astype(attn_ref.dtype)

    # Weighted values, batched over heads, produced directly in (q, h, d)
    # order so the merge back to (tq, inner) stays cheap.
    wv = jnp.einsum('hqk,hkd->qhd', p.astype(cdtype), vh,
                    preferred_element_type=jnp.float32)
    wv = wv.reshape(tq, inner).astype(cdtype)

    out = (jnp.dot(wv, wout_ref[...], preferred_element_type=jnp.float32)
           + bout_ref[...])
    out_ref[0] = out.astype(out_ref.dtype)


def _vmem_limit_bytes(N, dim, heads, dim_head, tq, in_itemsize, attn_itemsize):
    """Rough per-step working-set estimate, clamped so it is valid on all gens."""
    inner = heads * dim_head
    b = 0
    b += 2 * N * dim * in_itemsize                              # x block
    b += 2 * (3 * dim * inner + inner * dim + dim) * 4          # weights + bias
    b += 2 * tq * dim * in_itemsize                             # out block
    b += 2 * heads * tq * N * attn_itemsize                     # attn block
    b += 2 * heads * N * dim_head * in_itemsize                 # K/V scratch
    b += 4 * heads * tq * N * 4                                 # f32 softmax temps
    b += 2 * N * inner * 4                                      # K/V f32 proj temps
    est = int(b * 1.25)
    return max(32 * 1024 * 1024, min(est, 64 * 1024 * 1024))


def self_attention(x, w_qkv, w_out, b_out, *, heads, dim_head,
                   attn_dtype=None, compute_dtype=None):
    """x: (B, N, dim) -> (out (B, N, dim), attn (B, heads, N, N)).

    w_qkv: (3*inner, dim) torch nn.Linear convention (no bias)
    w_out: (dim, inner),  b_out: (dim,)
    attn_dtype   : dtype of returned attention weights (default: x.dtype).
    compute_dtype: MXU input dtype (default: x.dtype).  Pass jnp.bfloat16 to
                   run the matmuls in bf16 with f32 accumulation.
    """
    B, N, dim = x.shape
    inner = heads * dim_head
    assert w_qkv.shape == (3 * inner, dim)
    assert w_out.shape == (dim, inner)
    assert b_out.shape == (dim,)

    out_dtype = x.dtype
    attn_dtype = out_dtype if attn_dtype is None else jnp.dtype(attn_dtype)
    cdtype = x.dtype if compute_dtype is None else jnp.dtype(compute_dtype)

    # Query-row tile: whole sequence when small, else 128-row tiles.
    tq = N if N <= 128 else 128
    assert N % tq == 0, "sequence length must be a multiple of the q-tile"
    n_q_tiles = N // tq

    # Layout plumbing in the wrapper (free): split + transpose weights so the
    # kernel never transposes or lane-slices them, and fold the softmax scale
    # into Wq so there is no per-tile scaling multiply at all.
    scale = dim_head ** (-0.5)
    wq_t = (w_qkv[0 * inner:1 * inner].astype(jnp.float32).T * scale).astype(cdtype)
    wk_t = w_qkv[1 * inner:2 * inner].T.astype(cdtype)
    wv_t = w_qkv[2 * inner:3 * inner].T.astype(cdtype)
    wout_t = w_out.T.astype(cdtype)
    b_out2d = b_out.reshape(1, dim).astype(jnp.float32)
    x_c = x.astype(cdtype)

    kernel = functools.partial(_self_attention_kernel,
                               heads=heads, dim_head=dim_head, tq=tq)

    out_shapes = (
        jax.ShapeDtypeStruct((B, N, dim), out_dtype),
        jax.ShapeDtypeStruct((B, heads, N, N), attn_dtype),
    )

    in_itemsize = jnp.dtype(cdtype).itemsize
    attn_itemsize = jnp.dtype(attn_dtype).itemsize
    out_itemsize = jnp.dtype(out_dtype).itemsize

    cost = pl.CostEstimate(
        flops=int(2 * B * N * dim * 3 * inner            # q/k/v projections (k/v once per batch)
                  + 4 * B * heads * N * N * dim_head     # scores + weighted values
                  + 2 * B * N * inner * dim),            # output projection
        transcendentals=int(B * heads * N * N),          # softmax exp
        bytes_accessed=int(B * N * dim * in_itemsize                 # x read once per batch
                           + (4 * inner * dim + dim) * in_itemsize   # weights + bias
                           + B * N * dim * out_itemsize              # out write
                           + B * heads * N * N * attn_itemsize),     # attn write
    )

    vmem_limit = _vmem_limit_bytes(N, dim, heads, dim_head, tq,
                                   in_itemsize, attn_itemsize)

    return pl.pallas_call(
        kernel,
        out_shape=out_shapes,
        grid_spec=pltpu.PrefetchScalarGridSpec(
            num_scalar_prefetch=0,
            grid=(B, n_q_tiles),
            in_specs=[
                pl.BlockSpec((1, N, dim), lambda b, qi: (b, 0, 0)),    # x (resident across qi)
                pl.BlockSpec((dim, inner), lambda b, qi: (0, 0)),      # Wq^T * scale
                pl.BlockSpec((dim, inner), lambda b, qi: (0, 0)),      # Wk^T
                pl.BlockSpec((dim, inner), lambda b, qi: (0, 0)),      # Wv^T
                pl.BlockSpec((inner, dim), lambda b, qi: (0, 0)),      # Wout^T
                pl.BlockSpec((1, dim), lambda b, qi: (0, 0)),          # b_out
            ],
            out_specs=[
                pl.BlockSpec((1, tq, dim), lambda b, qi: (b, qi, 0)),
                pl.BlockSpec((1, heads, tq, N), lambda b, qi: (b, 0, qi, 0)),
            ],
            scratch_shapes=[
                pltpu.VMEM((heads, N, dim_head), cdtype),   # K cache, carried across qi
                pltpu.VMEM((heads, N, dim_head), cdtype),   # V cache, carried across qi
            ],
        ),
        # qi must be sequential ("arbitrary") so the K/V scratch carry is
        # valid; the batch axis stays "parallel" for megacore sharding.
        # TODO(synk): for B == 1 on v7x, add a 'parallel' heads grid axis so both
        # TensorCores get work and the attn block shrinks under the 64 MiB VMEM.
        compiler_params=pltpu.CompilerParams(
            dimension_semantics=("parallel", "arbitrary"),
            vmem_limit_bytes=vmem_limit),
        cost_estimate=cost,
    )(x_c, wq_t, wk_t, wv_t, wout_t, b_out2d)


def self_attention_ref(x, w_qkv, w_out, b_out, *, heads, dim_head):
    """Pure-JAX reference mirroring the PyTorch forward."""
    B, N, dim = x.shape
    inner = heads * dim_head
    qkv = x @ w_qkv.T                                       # (B, N, 3*inner)
    q, k, v = jnp.split(qkv, 3, axis=-1)

    def split_heads(t):
        return t.reshape(B, N, heads, dim_head).transpose(0, 2, 1, 3)

    q, k, v = split_heads(q), split_heads(k), split_heads(v)
    scores = jnp.einsum("bhqd,bhkd->bhqk", q, k) * (dim_head ** -0.5)
    attn = jax.nn.softmax(scores, axis=-1)
    wv = jnp.einsum("bhqk,bhkd->bhqd", attn, v)
    wv = wv.transpose(0, 2, 1, 3).reshape(B, N, inner)
    out = wv @ w_out.T + b_out
    return out, attn


def _run_case(key, B, N, dim, heads, dim_head):
    inner = heads * dim_head
    kx, kq, kw, kb = jax.random.split(key, 4)
    x = jax.random.normal(kx, (B, N, dim), dtype=jnp.float32)
    w_qkv = jax.random.normal(kq, (3 * inner, dim), dtype=jnp.float32) * 0.05
    w_out = jax.random.normal(kw, (dim, inner), dtype=jnp.float32) * 0.05
    b_out = jax.random.normal(kb, (dim,), dtype=jnp.float32) * 0.01

    out, attn = self_attention(x, w_qkv, w_out, b_out,
                               heads=heads, dim_head=dim_head)
    jax.block_until_ready(out)
    jax.block_until_ready(attn)

    out_ref, attn_ref = self_attention_ref(x, w_qkv, w_out, b_out,
                                           heads=heads, dim_head=dim_head)

    assert out.shape == (B, N, dim)
    assert attn.shape == (B, heads, N, N)
    # approx=True reciprocal on the softmax denom -> slightly relaxed tolerance.
    assert jnp.allclose(out, out_ref, atol=2e-3, rtol=2e-3)
    assert jnp.allclose(attn, attn_ref, atol=2e-3, rtol=2e-3)


if __name__ == "__main__":
    key = jax.random.PRNGKey(0)
    k1, k2 = jax.random.split(key, 2)

    # Small shape consistent with the module's forward (single q-tile).
    _run_case(k1, B=2, N=8, dim=32, heads=4, dim_head=8)
    # Multi-q-tile case (N=256 -> two 128-row tiles) to exercise the
    # once-per-batch K/V scratch carry across the sequential qi axis.
    _run_case(k2, B=2, N=256, dim=32, heads=4, dim_head=8)

    print("KERNEL_OK")
</pallas_src>

<mosaic_0001>
module attributes {stable_mosaic.version = 11 : i64} {
  func.func @_self_attention_kernel(%arg0: i32, %arg1: i32, %arg2: memref<1x8x32xf32, #tpu.memory_space<vmem>>, %arg3: memref<32x32xf32, #tpu.memory_space<vmem>>, %arg4: memref<32x32xf32, #tpu.memory_space<vmem>>, %arg5: memref<32x32xf32, #tpu.memory_space<vmem>>, %arg6: memref<32x32xf32, #tpu.memory_space<vmem>>, %arg7: memref<1x32xf32, #tpu.memory_space<vmem>>, %arg8: memref<1x8x32xf32, #tpu.memory_space<vmem>>, %arg9: memref<1x4x8x8xf32, #tpu.memory_space<vmem>>, %arg10: memref<4x8x8xf32, #tpu.memory_space<vmem>>, %arg11: memref<4x8x8xf32, #tpu.memory_space<vmem>>) attributes {dimension_semantics = [#tpu.dimension_semantics<parallel>, #tpu.dimension_semantics<arbitrary>], iteration_bounds = array<i64: 2, 1>, scalar_prefetch = 0 : i64, scratch_operands = 2 : i64, tpu.core_type = #tpu.core_type<tc>, window_params = [{transform_indices = @transform_0, window_bounds = array<i64: 1, 8, 32>}, {pipeline_mode = #tpu.pipeline_mode<synchronous>, transform_indices = @transform_1, window_bounds = array<i64: 32, 32>}, {pipeline_mode = #tpu.pipeline_mode<synchronous>, transform_indices = @transform_2, window_bounds = array<i64: 32, 32>}, {pipeline_mode = #tpu.pipeline_mode<synchronous>, transform_indices = @transform_3, window_bounds = array<i64: 32, 32>}, {pipeline_mode = #tpu.pipeline_mode<synchronous>, transform_indices = @transform_4, window_bounds = array<i64: 32, 32>}, {pipeline_mode = #tpu.pipeline_mode<synchronous>, transform_indices = @transform_5, window_bounds = array<i64: 1, 32>}, {transform_indices = @transform_6, window_bounds = array<i64: 1, 8, 32>}, {transform_indices = @transform_7, window_bounds = array<i64: 1, 4, 8, 8>}]} {
    %c0_i32 = arith.constant 0 : i32
    %0 = arith.cmpi eq, %arg1, %c0_i32 : i32
    %1 = arith.extui %0 : i1 to i32
    %c0_i32_0 = arith.constant 0 : i32
    %2 = arith.cmpi ne, %1, %c0_i32_0 : i32
    scf.if %2 {
      %c0_26 = arith.constant 0 : index
      %c0_27 = arith.constant 0 : index
      %c0_28 = arith.constant 0 : index
      %38 = vector.load %arg2[%c0_26, %c0_27, %c0_28] : memref<1x8x32xf32, #tpu.memory_space<vmem>>, vector<1x8x32xf32>
      %39 = vector.shape_cast %38 : vector<1x8x32xf32> to vector<8x32xf32>
      %c0_29 = arith.constant 0 : index
      %c0_30 = arith.constant 0 : index
      %40 = vector.load %arg4[%c0_29, %c0_30] : memref<32x32xf32, #tpu.memory_space<vmem>>, vector<32x32xf32>
      %cst_31 = arith.constant dense<0.000000e+00> : vector<8x32xf32>
      %41 = tpu.matmul %39, %40, %cst_31 {dimension_numbers = #tpu.dot_dimension_numbers<[1], [0], [0], [1], [0, 0, 1, 1], [], []>} : vector<8x32xf32>, vector<32x32xf32>, vector<8x32xf32> -> vector<8x32xf32>
      %c0_32 = arith.constant 0 : index
      %c0_33 = arith.constant 0 : index
      %42 = vector.load %arg5[%c0_32, %c0_33] : memref<32x32xf32, #tpu.memory_space<vmem>>, vector<32x32xf32>
      %cst_34 = arith.constant dense<0.000000e+00> : vector<8x32xf32>
      %43 = tpu.matmul %39, %42, %cst_34 {dimension_numbers = #tpu.dot_dimension_numbers<[1], [0], [0], [1], [0, 0, 1, 1], [], []>} : vector<8x32xf32>, vector<32x32xf32>, vector<8x32xf32> -> vector<8x32xf32>
      %44 = vector.shape_cast %41 : vector<8x32xf32> to vector<8x4x8xf32>
      %45 = vector.shape_cast %43 : vector<8x32xf32> to vector<8x4x8xf32>
      %46 = tpu.transpose %44, [1, 0, 2] : vector<8x4x8xf32> -> vector<4x8x8xf32>
      %c0_35 = arith.constant 0 : index
      %c0_36 = arith.constant 0 : index
      %c0_37 = arith.constant 0 : index
      %47 = vector.load %arg10[%c0_35, %c0_36, %c0_37] : memref<4x8x8xf32, #tpu.memory_space<vmem>>, vector<4x8x8xf32>
      tpu.vector_store %arg10[%c0_35, %c0_36, %c0_37], %46 {strides = array<i32>} : memref<4x8x8xf32, #tpu.memory_space<vmem>>, vector<4x8x8xf32>,
      %48 = tpu.transpose %45, [1, 0, 2] : vector<8x4x8xf32> -> vector<4x8x8xf32>
      %c0_38 = arith.constant 0 : index
      %c0_39 = arith.constant 0 : index
      %c0_40 = arith.constant 0 : index
      %49 = vector.load %arg11[%c0_38, %c0_39, %c0_40] : memref<4x8x8xf32, #tpu.memory_space<vmem>>, vector<4x8x8xf32>
      tpu.vector_store %arg11[%c0_38, %c0_39, %c0_40], %48 {strides = array<i32>} : memref<4x8x8xf32, #tpu.memory_space<vmem>>, vector<4x8x8xf32>,
    } else {
    }
    %c8_i32 = arith.constant 8 : i32
    %3 = arith.muli %arg1, %c8_i32 : i32
    %4 = tpu.assume_multiple %3, 8 : i32
    %c0 = arith.constant 0 : index
    %5 = arith.index_cast %4 : i32 to index
    %c0_1 = arith.constant 0 : index
    %6 = vector.load %arg2[%c0, %5, %c0_1] : memref<1x8x32xf32, #tpu.memory_space<vmem>>, vector<1x8x32xf32>
    %7 = vector.shape_cast %6 : vector<1x8x32xf32> to vector<8x32xf32>
    %c0_2 = arith.constant 0 : index
    %c0_3 = arith.constant 0 : index
    %8 = vector.load %arg3[%c0_2, %c0_3] : memref<32x32xf32, #tpu.memory_space<vmem>>, vector<32x32xf32>
    %cst = arith.constant dense<0.000000e+00> : vector<8x32xf32>
    %9 = tpu.matmul %7, %8, %cst {dimension_numbers = #tpu.dot_dimension_numbers<[1], [0], [0], [1], [0, 0, 1, 1], [], []>} : vector<8x32xf32>, vector<32x32xf32>, vector<8x32xf32> -> vector<8x32xf32>
    %10 = vector.shape_cast %9 : vector<8x32xf32> to vector<8x4x8xf32>
    %c0_4 = arith.constant 0 : index
    %c0_5 = arith.constant 0 : index
    %c0_6 = arith.constant 0 : index
    %11 = vector.load %arg10[%c0_4, %c0_5, %c0_6] : memref<4x8x8xf32, #tpu.memory_space<vmem>>, vector<4x8x8xf32>
    %c0_7 = arith.constant 0 : index
    %c0_8 = arith.constant 0 : index
    %c0_9 = arith.constant 0 : index
    %12 = vector.load %arg11[%c0_7, %c0_8, %c0_9] : memref<4x8x8xf32, #tpu.memory_space<vmem>>, vector<4x8x8xf32>
    "tpu.trace_start"() <{level = 10 : i32, message = "qhd,hkd->hqk"}> : () -> ()
    %cst_10 = arith.constant dense<0.000000e+00> : vector<4x8x8xf32>
    %13 = tpu.matmul %10, %11, %cst_10 {dimension_numbers = #tpu.dot_dimension_numbers<[2], [2], [0], [1], [0, 1, 0, 0, 1, 1], [1], [0]>} : vector<8x4x8xf32>, vector<4x8x8xf32>, vector<4x8x8xf32> -> vector<4x8x8xf32>
    "tpu.trace_stop"() : () -> ()
    %cst_11 = arith.constant dense<0xFF800000> : vector<4x8xf32>
    %14 = vector.multi_reduction <maximumf>, %13, %cst_11 [2] : vector<4x8x8xf32> to vector<4x8xf32>
    %15 = vector.shape_cast %14 : vector<4x8xf32> to vector<4x8x1xf32>
    %16 = vector.broadcast %15 : vector<4x8x1xf32> to vector<4x8x8xf32>
    %17 = arith.subf %13, %16 : vector<4x8x8xf32>
    %18 = math.exp %17 : vector<4x8x8xf32>
    %cst_12 = arith.constant dense<0.000000e+00> : vector<4x8xf32>
    %19 = vector.multi_reduction <add>, %18, %cst_12 [2] : vector<4x8x8xf32> to vector<4x8xf32>
    %20 = vector.shape_cast %19 : vector<4x8xf32> to vector<4x8x1xf32>
    %21 = tpu.reciprocal %20 {approx = true} : vector<4x8x1xf32> -> vector<4x8x1xf32>
    %22 = vector.broadcast %21 : vector<4x8x1xf32> to vector<4x8x8xf32>
    %23 = arith.mulf %18, %22 : vector<4x8x8xf32>
    %c0_13 = arith.constant 0 : index
    %c0_14 = arith.constant 0 : index
    %c0_15 = arith.constant 0 : index
    %c0_16 = arith.constant 0 : index
    %24 = vector.load %arg9[%c0_13, %c0_14, %c0_15, %c0_16] : memref<1x4x8x8xf32, #tpu.memory_space<vmem>>, vector<1x4x8x8xf32>
    %25 = vector.shape_cast %24 : vector<1x4x8x8xf32> to vector<4x8x8xf32>
    %26 = vector.shape_cast %23 : vector<4x8x8xf32> to vector<1x4x8x8xf32>
    tpu.vector_store %arg9[%c0_13, %c0_14, %c0_15, %c0_16], %26 {strides = array<i32>} : memref<1x4x8x8xf32, #tpu.memory_space<vmem>>, vector<1x4x8x8xf32>,
    "tpu.trace_start"() <{level = 10 : i32, message = "hqk,hkd->qhd"}> : () -> ()
    %cst_17 = arith.constant dense<0.000000e+00> : vector<4x8x8xf32>
    %27 = tpu.matmul %12, %23, %cst_17 {dimension_numbers = #tpu.dot_dimension_numbers<[1], [2], [2], [1], [0, 0, 0, 2, 1, 1], [0], [0]>} : vector<4x8x8xf32>, vector<4x8x8xf32>, vector<4x8x8xf32> -> vector<4x8x8xf32>
    %28 = tpu.transpose %27, [2, 0, 1] : vector<4x8x8xf32> -> vector<8x4x8xf32>
    "tpu.trace_stop"() : () -> ()
    %29 = vector.shape_cast %28 : vector<8x4x8xf32> to vector<8x32xf32>
    %c0_18 = arith.constant 0 : index
    %c0_19 = arith.constant 0 : index
    %30 = vector.load %arg6[%c0_18, %c0_19] : memref<32x32xf32, #tpu.memory_space<vmem>>, vector<32x32xf32>
    %cst_20 = arith.constant dense<0.000000e+00> : vector<8x32xf32>
    %31 = tpu.matmul %29, %30, %cst_20 {dimension_numbers = #tpu.dot_dimension_numbers<[1], [0], [0], [1], [0, 0, 1, 1], [], []>} : vector<8x32xf32>, vector<32x32xf32>, vector<8x32xf32> -> vector<8x32xf32>
    %c0_21 = arith.constant 0 : index
    %c0_22 = arith.constant 0 : index
    %32 = vector.load %arg7[%c0_21, %c0_22] : memref<1x32xf32, #tpu.memory_space<vmem>>, vector<1x32xf32>
    %33 = vector.broadcast %32 : vector<1x32xf32> to vector<8x32xf32>
    %34 = arith.addf %31, %33 : vector<8x32xf32>
    %c0_23 = arith.constant 0 : index
    %c0_24 = arith.constant 0 : index
    %c0_25 = arith.constant 0 : index
    %35 = vector.load %arg8[%c0_23, %c0_24, %c0_25] : memref<1x8x32xf32, #tpu.memory_space<vmem>>, vector<1x8x32xf32>
    %36 = vector.shape_cast %35 : vector<1x8x32xf32> to vector<8x32xf32>
    %37 = vector.shape_cast %34 : vector<8x32xf32> to vector<1x8x32xf32>
    tpu.vector_store %arg8[%c0_23, %c0_24, %c0_25], %37 {strides = array<i32>} : memref<1x8x32xf32, #tpu.memory_space<vmem>>, vector<1x8x32xf32>,
    return
  }
  func.func @transform_0(%arg0: i32, %arg1: i32) -> (i32, i32, i32) {
    %c0_i32 = arith.constant 0 : i32
    %c0_i32_0 = arith.constant 0 : i32
    %c0_i32_1 = arith.constant 0 : i32
    return %arg0, %c0_i32, %c0_i32_0 : i32, i32, i32
  }
  func.func @transform_1(%arg0: i32, %arg1: i32) -> (i32, i32) {
    %c0_i32 = arith.constant 0 : i32
    %c0_i32_0 = arith.constant 0 : i32
    %c0_i32_1 = arith.constant 0 : i32
    return %c0_i32, %c0_i32_0 : i32, i32
  }
  func.func @transform_2(%arg0: i32, %arg1: i32) -> (i32, i32) {
    %c0_i32 = arith.constant 0 : i32
    %c0_i32_0 = arith.constant 0 : i32
    %c0_i32_1 = arith.constant 0 : i32
    return %c0_i32, %c0_i32_0 : i32, i32
  }
  func.func @transform_3(%arg0: i32, %arg1: i32) -> (i32, i32) {
    %c0_i32 = arith.constant 0 : i32
    %c0_i32_0 = arith.constant 0 : i32
    %c0_i32_1 = arith.constant 0 : i32
    return %c0_i32, %c0_i32_0 : i32, i32
  }
  func.func @transform_4(%arg0: i32, %arg1: i32) -> (i32, i32) {
    %c0_i32 = arith.constant 0 : i32
    %c0_i32_0 = arith.constant 0 : i32
    %c0_i32_1 = arith.constant 0 : i32
    return %c0_i32, %c0_i32_0 : i32, i32
  }
  func.func @transform_5(%arg0: i32, %arg1: i32) -> (i32, i32) {
    %c0_i32 = arith.constant 0 : i32
    %c0_i32_0 = arith.constant 0 : i32
    %c0_i32_1 = arith.constant 0 : i32
    return %c0_i32, %c0_i32_0 : i32, i32
  }
  func.func @transform_6(%arg0: i32, %arg1: i32) -> (i32, i32, i32) {
    %c0_i32 = arith.constant 0 : i32
    %c0_i32_0 = arith.constant 0 : i32
    return %arg0, %arg1, %c0_i32 : i32, i32, i32
  }
  func.func @transform_7(%arg0: i32, %arg1: i32) -> (i32, i32, i32, i32) {
    %c0_i32 = arith.constant 0 : i32
    %c0_i32_0 = arith.constant 0 : i32
    %c0_i32_1 = arith.constant 0 : i32
    return %arg0, %c0_i32, %arg1, %c0_i32_0 : i32, i32, i32, i32
  }
}

</mosaic_0001>

<llo_original>
// kernel: tpu_custom_call.1
$region0: #{tpu_custom_call.1}
  #allocation0 [shape = 'u32[]', space=smem, size = 0x4, offset = 0x4, fixed_abs, tag = 'smem constant byte address 0x4 - core index']
  #allocation1 [shape = 'u32[72,128]{1,0:T(1,128)}', space=vmem, size = 0x9000, scoped, tag = 'internal scratch']
  #allocation2 [shape = 'f32[4,8,8]{2,1,0:T(8,128)}', space=vmem, size = 0x4000, scoped, tag = 'scratch operand']
  #allocation3 [shape = 'f32[4,8,8]{2,1,0:T(8,128)}', space=vmem, size = 0x4000, scoped, tag = 'scratch operand']
  %s0 = inlined_call_operand.hbm [shape: f32[2,8,32], index: 0, kind: input, shape index: {}]
  %s1 = inlined_call_operand.hbm [shape: f32[32,32], index: 1, kind: input, shape index: {}]
  %s2 = inlined_call_operand.hbm [shape: f32[32,32], index: 2, kind: input, shape index: {}]
  %s3 = inlined_call_operand.hbm [shape: f32[32,32], index: 3, kind: input, shape index: {}]
  %s4 = inlined_call_operand.hbm [shape: f32[32,32], index: 4, kind: input, shape index: {}]
  %s5 = inlined_call_operand.vmem [shape: f32[1,32], index: 5, kind: input, shape index: {}]
  %s6 = inlined_call_operand.hbm [shape: f32[2,8,32], index: 6, kind: output, shape index: {0}]
  %s7 = inlined_call_operand.hbm [shape: f32[2,4,8,8], index: 7, kind: output, shape index: {1}]
  %8 = xla_tuple %s6, %s7
  %s9 = sld [smem:[#allocation0]]
  $region89: #{tpu_custom_call.1} parent=0
    _
  %s11 = ssub.s32 1, %s9
  %s12 = scalar_select 0, %s11, %s9
  $region1: #{tpu_custom_call.1} parent=0
    #allocation4 [shape = 'u8[8192]{0}', space=vmem, size = 0x2000, scoped, tag = 'input window, operand 0']
    #allocation5 [shape = 's32[2]{0}', space=sflag, size = 0x8, scoped, tag = 'scoped memory for tpu_custom_call.1']
    #allocation6 [shape = 's32[2]{0}', space=sflag, size = 0x8, scoped, tag = 'scoped memory for tpu_custom_call.1']
    #allocation7 [shape = 'u8[16384]{0}', space=vmem, size = 0x4000, scoped, tag = 'input window, operand 1, single buffered']
    #allocation8 [shape = 's32[1]{0}', space=sflag, size = 0x4, scoped, tag = 'scoped memory for tpu_custom_call.1']
    #allocation9 [shape = 'u8[16384]{0}', space=vmem, size = 0x4000, scoped, tag = 'input window, operand 2, single buffered']
    #allocation10 [shape = 'u8[16384]{0}', space=vmem, size = 0x4000, scoped, tag = 'input window, operand 3, single buffered']
    #allocation11 [shape = 's32[1]{0}', space=sflag, size = 0x4, scoped, tag = 'scoped memory for tpu_custom_call.1']
    #allocation12 [shape = 'u8[16384]{0}', space=vmem, size = 0x4000, scoped, tag = 'input window, operand 4, single buffered']
    #allocation13 [shape = 'u8[8192]{0}', space=vmem, size = 0x2000, scoped, tag = 'output window, operand 0']
    #allocation14 [shape = 'u8[32768]{0}', space=vmem, size = 0x8000, scoped, tag = 'output window, operand 1']
    #allocation15 [shape = 's32[2]{0}', space=sflag, size = 0x8, scoped, tag = 'scoped memory for tpu_custom_call.1']
    %13 = vsyncpa [#allocation5], 0
    %s14 = scalar_lea.sflag [#allocation5], 1
    %15 = vsyncpa %s14, 0
    %16 = vsyncpa [#allocation8], 0
    %17 = vsyncpa [#allocation11], 0
    %18 = vsyncpa [#allocation6], 0
    %s19 = scalar_lea.sflag [#allocation6], 1
    %20 = vsyncpa %s19, 0
    %21 = vsyncpa [#allocation15], 0
    %s22 = scalar_lea.sflag [#allocation15], 1
    %23 = vsyncpa %s22, 0
    loop: start=0, step=1, limit=4
    $region2: #{tpu_custom_call.1} parent=1 // loop_pre_header
      _
    $region3: #{tpu_custom_call.1} parent=1 // loop_header
      %s25 = sphi 0, %s29
      %p26 = scmp.ge.s32.totalorder %s25, 4
      %s32 = sphi 0, %s44
      %s33 = sphi 0, %s40
      %s34 = sphi 0, %s32
      %s35 = sphi 0, %s33
      %s36 = sphi 0, %s34
      %s37 = sphi 0, %s35
      %s47 = sphi 0, %s49
      %s50 = sphi 0, %s47
      %s51 = sphi 0, %s50
      %s67 = sphi 0, %s51
      %s71 = sphi 0, %s71
      %s73 = sphi 0, %s71
      %s74 = sphi 0, %s73
      %s88 = sphi 0, %s74
      %s92 = sphi 0, %s92
      %s94 = sphi 0, %s92
      %s95 = sphi 0, %s94
      %s109 = sphi 0, %s95
      %s113 = sphi 0, %s113
      %s115 = sphi 0, %s113
      %s116 = sphi 0, %s115
      %s130 = sphi 0, %s116
      %s134 = sphi 0, %s134
      %s136 = sphi 0, %s134
      %s137 = sphi 0, %s136
      %s151 = sphi 0, %s137
      %s155 = sphi 0, %s155
      %s157 = sphi 0, %s155
      %s158 = sphi 0, %s157
      %s172 = sphi 0, %s158
      %s180 = sphi 0, %s182
      %s183 = sphi 0, %s180
      %s184 = sphi 0, %s183
      %s200 = sphi 0, %s184
      %s208 = sphi 0, %s210
      %s211 = sphi 0, %s208
      %s212 = sphi 0, %s211
      %s228 = sphi 0, %s212
    $region4: #{tpu_custom_call.1} parent=1 // loop_header_branch
      %28 = sbr.rel (%p26) target = $region8
    $region5: #{tpu_custom_call.1} parent=1 // loop_body
      %s30 = ssub.s32 %s25, 1
      %s31 = ssub.s32 %s25, 2
      %s38 = sadd.s32 1, %s33
      %p39 = scmp.ge.s32.totalorder %s38, 1
      %s40 = scalar_select %p39, 0, %s38
      %s41 = sadd.s32 1, %s32
      %s42 = scalar_select %p39, %s41, %s32
      %p43 = scmp.ge.s32.totalorder %s42, 2
      %s44 = scalar_select %p43, 0, %s42
      %s45 = ssub.s32 %s32, %s44
      %p46 = scmp.eq.s32.totalorder %s45, 0
      %s48 = sadd.s32 %s47, 1
      %s49 = scalar_select %p46, %s47, %s48
      %p52 = pneg %p46
      %p53 = scmp.eq.s32.totalorder %s25, 1
      %p54 = por %p52, %p53
      %p55 = scmp.ne.s32.totalorder %s47, %s50
      %p56 = scmp.eq.s32.totalorder %s25, 0
      %p57 = por %p55, %p56
      %p58 = scmp.ne.s32.totalorder %s47, %s50
      %p59 = scmp.eq.s32.totalorder %s30, 1
      %p60 = por %p58, %p59
      %p61 = scmp.ne.s32.totalorder %s50, %s51
      %p62 = scmp.eq.s32.totalorder %s30, 0
      %p63 = por %p61, %p62
      %p64 = scmp.ne.s32.totalorder %s50, %s51
      %p65 = scmp.eq.s32.totalorder %s31, 1
      %p66 = por %p64, %p65
      %p68 = scmp.ne.s32.totalorder %s51, %s67
      %p69 = scmp.eq.s32.totalorder %s31, 0
      %p70 = por %p68, %p69
      %s72 = sadd.s32 %s71, 1
      %p75 = scmp.eq.s32.totalorder %s25, 1
      %p76 = scmp.ne.s32.totalorder %s71, %s73
      %p77 = scmp.eq.s32.totalorder %s25, 0
      %p78 = por %p76, %p77
      %p79 = scmp.ne.s32.totalorder %s71, %s73
      %p80 = scmp.eq.s32.totalorder %s30, 1
      %p81 = por %p79, %p80
      %p82 = scmp.ne.s32.totalorder %s73, %s74
      %p83 = scmp.eq.s32.totalorder %s30, 0
      %p84 = por %p82, %p83
      %p85 = scmp.ne.s32.totalorder %s73, %s74
      %p86 = scmp.eq.s32.totalorder %s31, 1
      %p87 = por %p85, %p86
      %p89 = scmp.ne.s32.totalorder %s74, %s88
      %p90 = scmp.eq.s32.totalorder %s31, 0
      %p91 = por %p89, %p90
      %s93 = sadd.s32 %s92, 1
      %p96 = scmp.eq.s32.totalorder %s25, 1
      %p97 = scmp.ne.s32.totalorder %s92, %s94
      %p98 = scmp.eq.s32.totalorder %s25, 0
      %p99 = por %p97, %p98
      %p100 = scmp.ne.s32.totalorder %s92, %s94
      %p101 = scmp.eq.s32.totalorder %s30, 1
      %p102 = por %p100, %p101
      %p103 = scmp.ne.s32.totalorder %s94, %s95
      %p104 = scmp.eq.s32.totalorder %s30, 0
      %p105 = por %p103, %p104
      %p106 = scmp.ne.s32.totalorder %s94, %s95
      %p107 = scmp.eq.s32.totalorder %s31, 1
      %p108 = por %p106, %p107
      %p110 = scmp.ne.s32.totalorder %s95, %s109
      %p111 = scmp.eq.s32.totalorder %s31, 0
      %p112 = por %p110, %p111
      %s114 = sadd.s32 %s113, 1
      %p117 = scmp.eq.s32.totalorder %s25, 1
      %p118 = scmp.ne.s32.totalorder %s113, %s115
      %p119 = scmp.eq.s32.totalorder %s25, 0
      %p120 = por %p118, %p119
      %p121 = scmp.ne.s32.totalorder %s113, %s115
      %p122 = scmp.eq.s32.totalorder %s30, 1
      %p123 = por %p121, %p122
      %p124 = scmp.ne.s32.totalorder %s115, %s116
      %p125 = scmp.eq.s32.totalorder %s30, 0
      %p126 = por %p124, %p125
      %p127 = scmp.ne.s32.totalorder %s115, %s116
      %p128 = scmp.eq.s32.totalorder %s31, 1
      %p129 = por %p127, %p128
      %p131 = scmp.ne.s32.totalorder %s116, %s130
      %p132 = scmp.eq.s32.totalorder %s31, 0
      %p133 = por %p131, %p132
      %s135 = sadd.s32 %s134, 1
      %p138 = scmp.eq.s32.totalorder %s25, 1
      %p139 = scmp.ne.s32.totalorder %s134, %s136
      %p140 = scmp.eq.s32.totalorder %s25, 0
      %p141 = por %p139, %p140
      %p142 = scmp.ne.s32.totalorder %s134, %s136
      %p143 = scmp.eq.s32.totalorder %s30, 1
      %p144 = por %p142, %p143
      %p145 = scmp.ne.s32.totalorder %s136, %s137
      %p146 = scmp.eq.s32.totalorder %s30, 0
      %p147 = por %p145, %p146
      %p148 = scmp.ne.s32.totalorder %s136, %s137
      %p149 = scmp.eq.s32.totalorder %s31, 1
      %p150 = por %p148, %p149
      %p152 = scmp.ne.s32.totalorder %s137, %s151
      %p153 = scmp.eq.s32.totalorder %s31, 0
      %p154 = por %p152, %p153
      %s156 = sadd.s32 %s155, 1
      %p159 = scmp.eq.s32.totalorder %s25, 1
      %p160 = scmp.ne.s32.totalorder %s155, %s157
      %p161 = scmp.eq.s32.totalorder %s25, 0
      %p162 = por %p160, %p161
      %p163 = scmp.ne.s32.totalorder %s155, %s157
      %p164 = scmp.eq.s32.totalorder %s30, 1
      %p165 = por %p163, %p164
      %p166 = scmp.ne.s32.totalorder %s157, %s158
      %p167 = scmp.eq.s32.totalorder %s30, 0
      %p168 = por %p166, %p167
      %p169 = scmp.ne.s32.totalorder %s157, %s158
      %p170 = scmp.eq.s32.totalorder %s31, 1
      %p171 = por %p169, %p170
      %p173 = scmp.ne.s32.totalorder %s158, %s172
      %p174 = scmp.eq.s32.totalorder %s31, 0
      %p175 = por %p173, %p174
      %s176 = ssub.s32 %s32, %s44
      %s177 = ssub.s32 %s33, %s40
      %s178 = sor.u32 %s176, %s177
      %p179 = scmp.eq.s32.totalorder %s178, 0
      %s181 = sadd.s32 %s180, 1
      %s182 = scalar_select %p179, %s180, %s181
      %p185 = pneg %p179
      %p186 = scmp.eq.s32.totalorder %s25, 1
      %p187 = por %p185, %p186
      %p188 = scmp.ne.s32.totalorder %s180, %s183
      %p189 = scmp.eq.s32.totalorder %s25, 0
      %p190 = por %p188, %p189
      %p191 = scmp.ne.s32.totalorder %s180, %s183
      %p192 = scmp.eq.s32.totalorder %s30, 1
      %p193 = por %p191, %p192
      %p194 = scmp.ne.s32.totalorder %s183, %s184
      %p195 = scmp.eq.s32.totalorder %s30, 0
      %p196 = por %p194, %p195
      %p197 = scmp.ne.s32.totalorder %s183, %s184
      %p198 = scmp.eq.s32.totalorder %s31, 1
      %p199 = por %p197, %p198
      %p201 = scmp.ne.s32.totalorder %s184, %s200
      %p202 = scmp.eq.s32.totalorder %s31, 0
      %p203 = por %p201, %p202
      %s204 = ssub.s32 %s32, %s44
      %s205 = ssub.s32 %s33, %s40
      %s206 = sor.u32 %s204, %s205
      %p207 = scmp.eq.s32.totalorder %s206, 0
      %s209 = sadd.s32 %s208, 1
      %s210 = scalar_select %p207, %s208, %s209
      %p213 = pneg %p207
      %p214 = scmp.eq.s32.totalorder %s25, 1
      %p215 = por %p213, %p214
      %p216 = scmp.ne.s32.totalorder %s208, %s211
      %p217 = scmp.eq.s32.totalorder %s25, 0
      %p218 = por %p216, %p217
      %p219 = scmp.ne.s32.totalorder %s208, %s211
      %p220 = scmp.eq.s32.totalorder %s30, 1
      %p221 = por %p219, %p220
      %p222 = scmp.ne.s32.totalorder %s211, %s212
      %p223 = scmp.eq.s32.totalorder %s30, 0
      %p224 = por %p222, %p223
      %p225 = scmp.ne.s32.totalorder %s211, %s212
      %p226 = scmp.eq.s32.totalorder %s31, 1
      %p227 = por %p225, %p226
      %p229 = scmp.ne.s32.totalorder %s212, %s228
      %p230 = scmp.eq.s32.totalorder %s31, 0
      %p231 = por %p229, %p230
      %p232 = scmp.le.s32.totalorder 1, %s25
      %p233 = scmp.lt.s32.totalorder %s25, 3
      %p234 = pnand %p232, %p233
      %p235 = pneg %p234
      // Predicated region
      $region9: #{tpu_custom_call.1} parent=5 // pred_check
        _
      $region10: #{tpu_custom_call.1} parent=5 // pred_check_branch
        %237 = sbr.rel (%p234) target = $region12
      $region11: #{tpu_custom_call.1} parent=5 // pred_region
        %s238 = ssub.s32 %s25, 1
        // Predicated region
        $region13: #{tpu_custom_call.1} parent=11 // pred_check
          %p239 = pneg %p84
        $region14: #{tpu_custom_call.1} parent=11 // pred_check_branch
          %241 = sbr.rel (%p239) target = $region16
        $region15: #{tpu_custom_call.1} parent=11 // pred_region
          %243 = vsyncadd [#allocation8], 0
          %s244 = sshll.u32 %s1, 4
          %s245 = int_to_ptr.hbm [resolvable:$true] %s244
          %s246 = sshll.u32 [#allocation7], 4
          %s247 = int_to_ptr.vmem [resolvable:$true] %s246
          %252 = dma.hbm_to_vmem [thread:$0]  %s245, 512, %s247, [#allocation8], 128, 128, 8
        $region16: #{tpu_custom_call.1} parent=11 // pred_fallthru
          _
        // Predicated region
        $region17: #{tpu_custom_call.1} parent=11 // pred_check
          %p253 = pneg %p105
        $region18: #{tpu_custom_call.1} parent=11 // pred_check_branch
          %255 = sbr.rel (%p253) target = $region20
        $region19: #{tpu_custom_call.1} parent=11 // pred_region
          %257 = vsyncadd [#allocation8], 0
          %s258 = sshll.u32 %s2, 4
          %s259 = int_to_ptr.hbm [resolvable:$true] %s258
          %s260 = sshll.u32 [#allocation9], 4
          %s261 = int_to_ptr.vmem [resolvable:$true] %s260
          %266 = dma.hbm_to_vmem [thread:$0]  %s259, 512, %s261, [#allocation8], 128, 128, 8
        $region20: #{tpu_custom_call.1} parent=11 // pred_fallthru
          _
        // Predicated region
        $region21: #{tpu_custom_call.1} parent=11 // pred_check
          %p267 = pneg %p126
        $region22: #{tpu_custom_call.1} parent=11 // pred_check_branch
          %269 = sbr.rel (%p267) target = $region24
        $region23: #{tpu_custom_call.1} parent=11 // pred_region
          %271 = vsyncadd [#allocation11], 0
          %s272 = sshll.u32 %s3, 4
          %s273 = int_to_ptr.hbm [resolvable:$true] %s272
          %s274 = sshll.u32 [#allocation10], 4
          %s275 = int_to_ptr.vmem [resolvable:$true] %s274
          %280 = dma.hbm_to_vmem [thread:$0]  %s273, 512, %s275, [#allocation11], 128, 128, 8
        $region24: #{tpu_custom_call.1} parent=11 // pred_fallthru
          _
        // Predicated region
        $region25: #{tpu_custom_call.1} parent=11 // pred_check
          %p281 = pneg %p147
        $region26: #{tpu_custom_call.1} parent=11 // pred_check_branch
          %283 = sbr.rel (%p281) target = $region28
        $region27: #{tpu_custom_call.1} parent=11 // pred_region
          %285 = vsyncadd [#allocation11], 0
          %s286 = sshll.u32 %s4, 4
          %s287 = int_to_ptr.hbm [resolvable:$true] %s286
          %s288 = sshll.u32 [#allocation12], 4
          %s289 = int_to_ptr.vmem [resolvable:$true] %s288
          %294 = dma.hbm_to_vmem [thread:$0]  %s287, 512, %s289, [#allocation11], 128, 128, 8
        $region28: #{tpu_custom_call.1} parent=11 // pred_fallthru
          _
        // Predicated region
        $region29: #{tpu_custom_call.1} parent=11 // pred_check
          %p295 = pneg %p168
        $region30: #{tpu_custom_call.1} parent=11 // pred_check_branch
          %297 = sbr.rel (%p295) target = $region32
        $region31: #{tpu_custom_call.1} parent=11 // pred_region
          _
        $region32: #{tpu_custom_call.1} parent=11 // pred_fallthru
          _
      $region12: #{tpu_custom_call.1} parent=5 // pred_fallthru
        _
      %p298 = scmp.lt.s32.totalorder %s25, 2
      // Predicated region
      $region33: #{tpu_custom_call.1} parent=5 // pred_check
        %p299 = pneg %p298
      $region34: #{tpu_custom_call.1} parent=5 // pred_check_branch
        %301 = sbr.rel (%p299) target = $region36
      $region35: #{tpu_custom_call.1} parent=5 // pred_region
        // Predicated region
        $region37: #{tpu_custom_call.1} parent=35 // pred_check
          %p302 = pneg %p57
        $region38: #{tpu_custom_call.1} parent=35 // pred_check_branch
          %304 = sbr.rel (%p302) target = $region40
        $region39: #{tpu_custom_call.1} parent=35 // pred_region
          %s305 = sand.u32 %s47, 1
          %s306 = scalar_lea.sflag [#allocation5], %s305
          %s307 = sand.u32 %s47, 1
          %s308 = smul.addr %s307, 8
          %s309 = scalar_lea.vmem [#allocation4], %s308
          %311 = vsyncadd %s306, 0
          %s312 = smul.addr %s32, 8
          %s313 = scalar_lea.hbm %s0, %s312
          %s315 = sshll.u32 %s313, 4
          %s316 = int_to_ptr.hbm [resolvable:$true] %s315
          %s317 = sshll.u32 %s309, 4
          %s318 = int_to_ptr.vmem [resolvable:$true] %s317
          %320 = dma.hbm_to_vmem [thread:$0]  %s316, 128, %s318, %s306
        $region40: #{tpu_custom_call.1} parent=35 // pred_fallthru
          _
      $region36: #{tpu_custom_call.1} parent=5 // pred_fallthru
        _
      %p321 = scmp.le.s32.totalorder 1, %s25
      %p322 = scmp.lt.s32.totalorder %s25, 3
      %p323 = pnand %p321, %p322
      %p324 = pneg %p323
      // Predicated region
      $region41: #{tpu_custom_call.1} parent=5 // pred_check
        _
      $region42: #{tpu_custom_call.1} parent=5 // pred_check_branch
        %326 = sbr.rel (%p323) target = $region44
      $region43: #{tpu_custom_call.1} parent=5 // pred_region
        %s327 = ssub.s32 %s25, 1
        %s328 = sand.u32 %s50, 1
        %s329 = scalar_lea.sflag [#allocation5], %s328
        %s330 = sand.u32 %s50, 1
        %s331 = smul.addr %s330, 8
        %s332 = scalar_lea.vmem [#allocation4], %s331
        // Predicated region
        $region45: #{tpu_custom_call.1} parent=43 // pred_check
          %p333 = pneg %p63
        $region46: #{tpu_custom_call.1} parent=43 // pred_check_branch
          %335 = sbr.rel (%p333) target = $region48
        $region47: #{tpu_custom_call.1} parent=43 // pred_region
          %337 = dma.done %s329, 128
        $region48: #{tpu_custom_call.1} parent=43 // pred_fallthru
          _
        // Predicated region
        $region49: #{tpu_custom_call.1} parent=43 // pred_check
          %p338 = pneg %p84
        $region50: #{tpu_custom_call.1} parent=43 // pred_check_branch
          %340 = sbr.rel (%p338) target = $region52
        $region51: #{tpu_custom_call.1} parent=43 // pred_region
          %342 = dma.done [#allocation8], 512
        $region52: #{tpu_custom_call.1} parent=43 // pred_fallthru
          _
        // Predicated region
        $region53: #{tpu_custom_call.1} parent=43 // pred_check
          %p343 = pneg %p105
        $region54: #{tpu_custom_call.1} parent=43 // pred_check_branch
          %345 = sbr.rel (%p343) target = $region56
        $region55: #{tpu_custom_call.1} parent=43 // pred_region
          %347 = dma.done [#allocation8], 512
        $region56: #{tpu_custom_call.1} parent=43 // pred_fallthru
          _
        // Predicated region
        $region57: #{tpu_custom_call.1} parent=43 // pred_check
          %p348 = pneg %p126
        $region58: #{tpu_custom_call.1} parent=43 // pred_check_branch
          %350 = sbr.rel (%p348) target = $region60
        $region59: #{tpu_custom_call.1} parent=43 // pred_region
          %352 = dma.done [#allocation11], 512
        $region60: #{tpu_custom_call.1} parent=43 // pred_fallthru
          _
        // Predicated region
        $region61: #{tpu_custom_call.1} parent=43 // pred_check
          %p353 = pneg %p147
        $region62: #{tpu_custom_call.1} parent=43 // pred_check_branch
          %355 = sbr.rel (%p353) target = $region64
        $region63: #{tpu_custom_call.1} parent=43 // pred_region
          %357 = dma.done [#allocation11], 512
        $region64: #{tpu_custom_call.1} parent=43 // pred_fallthru
          _
        %s358 = sand.u32 %s50, 1
        %s359 = scalar_lea.sflag [#allocation5], %s358
        %s360 = sand.u32 %s50, 1
        %s361 = smul.addr %s360, 8
        %s362 = scalar_lea.vmem [#allocation4], %s361
        %p363 = pneg %p63
        %p364 = pneg %p60
        %p365 = pneg %p84
        %p366 = pneg %p81
        %p367 = pneg %p105
        %p368 = pneg %p102
        %p369 = pneg %p126
        %p370 = pneg %p123
        %p371 = pneg %p147
        %p372 = pneg %p144
        %p373 = pneg %p168
        %p374 = pneg %p165
        %p375 = pneg %p196
        %p376 = pneg %p193
        %s377 = sand.u32 %s183, 1
        %s378 = scalar_lea.sflag [#allocation6], %s377
        %s379 = sand.u32 %s183, 1
        %s380 = smul.addr %s379, 8
        %s381 = scalar_lea.vmem [#allocation13], %s380
        %p382 = pneg %p224
        %p383 = pneg %p221
        %s384 = sand.u32 %s211, 1
        %s385 = scalar_lea.sflag [#allocation15], %s384
        %s386 = sand.u32 %s211, 1
        %s387 = smul.addr %s386, 32
        %s388 = scalar_lea.vmem [#allocation14], %s387
        %p389 = scmp.eq.s32.totalorder %s35, 0
        // Predicated region
        $region65: #{tpu_custom_call.1} parent=43 // pred_check
          %p390 = pneg %p389
        $region66: #{tpu_custom_call.1} parent=43 // pred_check_branch
          %392 = sbr.rel (%p390) target = $region68
        $region67: #{tpu_custom_call.1} parent=43 // pred_region
          %v393 = vld [vmem:[%s332] sm:$0xff]
          %v394 = vld [vmem:[#allocation9] sm:$0xff]
          %v395 = vld [vmem:[#allocation9 + $0x8] sm:$0xff]
          %v396 = vld [vmem:[#allocation9 + $0x10] sm:$0xff]
          %v397 = vld [vmem:[#allocation9 + $0x18] sm:$0xff]
          %vm398 = vcmask 261120
          %v400 = vsel %vm398, %v393, 0
          %402 = vmatpush.msra.mxu0 0.0
          %403 = vmatpush.msra.mxu0 0.0
          %404 = vmatpush.msra.mxu0 0.0
          %405 = vmatpush.msra.mxu0 0.0
          %406 = vmatpush.msra.mxu0 0.0
          %407 = vmatpush.msra.mxu0 0.0
          %408 = vmatpush.msra.mxu0 0.0
          %409 = vmatpush.msra.mxu0 0.0
          %410 = vmatpush.msra.mxu0 0.0
          %411 = vmatpush.msra.mxu0 0.0
          %412 = vmatpush.msra.mxu0 0.0
          %413 = vmatpush.msra.mxu0 0.0
          %414 = vmatpush.msra.mxu0 %v397
          %415 = vmatpush.msra.mxu0 %v396
          %416 = vmatpush.msra.mxu0 %v395
          %417 = vmatpush.msra.mxu0 %v394
          %418 = vmatmul.f32.gmra.mxu0 %v400
          %v419 = vpop.f32.mrf.mxu0
          %v420 = vadd.f32 0.0, %v419
          %421 = vdwg.mxu0
          %v422 = vld [vmem:[#allocation10] sm:$0xff]
          %v423 = vld [vmem:[#allocation10 + $0x8] sm:$0xff]
          %v424 = vld [vmem:[#allocation10 + $0x10] sm:$0xff]
          %v425 = vld [vmem:[#allocation10 + $0x18] sm:$0xff]
          %426 = vmatpush.msra.mxu0 0.0
          %427 = vmatpush.msra.mxu0 0.0
          %428 = vmatpush.msra.mxu0 0.0
          %429 = vmatpush.msra.mxu0 0.0
          %430 = vmatpush.msra.mxu0 0.0
          %431 = vmatpush.msra.mxu0 0.0
          %432 = vmatpush.msra.mxu0 0.0
          %433 = vmatpush.msra.mxu0 0.0
          %434 = vmatpush.msra.mxu0 0.0
          %435 = vmatpush.msra.mxu0 0.0
          %436 = vmatpush.msra.mxu0 0.0
          %437 = vmatpush.msra.mxu0 0.0
          %438 = vmatpush.msra.mxu0 %v425
          %439 = vmatpush.msra.mxu0 %v424
          %440 = vmatpush.msra.mxu0 %v423
          %441 = vmatpush.msra.mxu0 %v422
          %442 = vmatmul.f32.gmra.mxu0 %v400
          %v443 = vpop.f32.mrf.mxu0
          %v444 = vadd.f32 0.0, %v443
          %445 = vdwg.mxu0
          %447 = vrot.lane.b32.xlu0 %v420, 120
          %v448 = vpop.permute.xlu0 %447
          %450 = vrot.lane.b32.xlu0 %v420, 112
          %v451 = vpop.permute.xlu0 %450
          %453 = vrot.lane.b32.xlu0 %v420, 104
          %v454 = vpop.permute.xlu0 %453
          %v456 = vrot.slane %v451, 4
          %vm457 = vcmask 1047556
          %v458 = vsel %vm457, %v456, %v420
          %v459 = vrot.slane %v420, 4
          %v460 = vsel %vm457, %v451, %v459
          %v462 = vunpack.c.l.s4 1983009808
          %v463 = vunpack.c.0.s8 %v462
          %v464 = vperm.slane %v458, %v463
          %v466 = vunpack.c.l.s4 1983009808
          %v467 = vunpack.c.0.s8 %v466
          %v468 = vperm.slane %v460, %v467
          %v469 = vrot.slane %v454, 4
          %v470 = vsel %vm457, %v469, %v448
          %v471 = vrot.slane %v448, 4
          %v472 = vsel %vm457, %v454, %v471
          %v474 = vunpack.c.l.s4 1983009808
          %v475 = vunpack.c.0.s8 %v474
          %v476 = vperm.slane %v470, %v475
          %v478 = vunpack.c.l.s4 1983009808
          %v479 = vunpack.c.0.s8 %v478
          %v480 = vperm.slane %v472, %v479
          %v481 = vrot.slane %v476, 4
          %v482 = vsel %vm457, %v481, %v464
          %v483 = vrot.slane %v464, 4
          %v484 = vsel %vm457, %v476, %v483
          %v486 = vunpack.c.l.s4 1934713408
          %v487 = vunpack.c.0.s8 %v486
          %v488 = vperm.slane %v482, %v487
          %v490 = vunpack.c.l.s4 1934713408
          %v491 = vunpack.c.0.s8 %v490
          %v492 = vperm.slane %v484, %v491
          %v493 = vrot.slane %v480, 4
          %v494 = vsel %vm457, %v493, %v468
          %v495 = vrot.slane %v468, 4
          %v496 = vsel %vm457, %v480, %v495
          %v498 = vunpack.c.l.s4 1934713408
          %v499 = vunpack.c.0.s8 %v498
          %v500 = vperm.slane %v494, %v499
          %v502 = vunpack.c.l.s4 1934713408
          %v503 = vunpack.c.0.s8 %v502
          %v504 = vperm.slane %v496, %v503
          %v505 = vrot.slane %v488, 4
          %v506 = vsel %vm457, 0.0, %v505
          %v507 = vrot.slane %v492, 4
          %v508 = vsel %vm457, 0.0, %v507
          %v509 = vrot.slane %v500, 4
          %v510 = vsel %vm457, 0.0, %v509
          %v511 = vrot.slane %v504, 4
          %v512 = vsel %vm457, 0.0, %v511
          %514 = vrot.lane.b32.xlu0 %v444, 120
          %v515 = vpop.permute.xlu0 %514
          %517 = vrot.lane.b32.xlu0 %v444, 112
          %v518 = vpop.permute.xlu0 %517
          %520 = vrot.lane.b32.xlu0 %v444, 104
          %v521 = vpop.permute.xlu0 %520
          %v523 = vrot.slane %v518, 4
          %v524 = vsel %vm457, %v523, %v444
          %v525 = vrot.slane %v444, 4
          %v526 = vsel %vm457, %v518, %v525
          %v528 = vunpack.c.l.s4 1983009808
          %v529 = vunpack.c.0.s8 %v528
          %v530 = vperm.slane %v524, %v529
          %v532 = vunpack.c.l.s4 1983009808
          %v533 = vunpack.c.0.s8 %v532
          %v534 = vperm.slane %v526, %v533
          %v535 = vrot.slane %v521, 4
          %v536 = vsel %vm457, %v535, %v515
          %v537 = vrot.slane %v515, 4
          %v538 = vsel %vm457, %v521, %v537
          %v540 = vunpack.c.l.s4 1983009808
          %v541 = vunpack.c.0.s8 %v540
          %v542 = vperm.slane %v536, %v541
          %v544 = vunpack.c.l.s4 1983009808
          %v545 = vunpack.c.0.s8 %v544
          %v546 = vperm.slane %v538, %v545
          %v547 = vrot.slane %v542, 4
          %v548 = vsel %vm457, %v547, %v530
          %v549 = vrot.slane %v530, 4
          %v550 = vsel %vm457, %v542, %v549
          %v552 = vunpack.c.l.s4 1934713408
          %v553 = vunpack.c.0.s8 %v552
          %v554 = vperm.slane %v548, %v553
          %v556 = vunpack.c.l.s4 1934713408
          %v557 = vunpack.c.0.s8 %v556
          %v558 = vperm.slane %v550, %v557
          %v559 = vrot.slane %v546, 4
          %v560 = vsel %vm457, %v559, %v534
          %v561 = vrot.slane %v534, 4
          %v562 = vsel %vm457, %v546, %v561
          %v564 = vunpack.c.l.s4 1934713408
          %v565 = vunpack.c.0.s8 %v564
          %v566 = vperm.slane %v560, %v565
          %v568 = vunpack.c.l.s4 1934713408
          %v569 = vunpack.c.0.s8 %v568
          %v570 = vperm.slane %v562, %v569
          %v571 = vrot.slane %v554, 4
          %v572 = vsel %vm457, 0.0, %v571
          %v573 = vrot.slane %v558, 4
          %v574 = vsel %vm457, 0.0, %v573
          %v575 = vrot.slane %v566, 4
          %v576 = vsel %vm457, 0.0, %v575
          %v577 = vrot.slane %v570, 4
          %v578 = vsel %vm457, 0.0, %v577
          %v579 = vsel %vm457, %v507, %v488
          %v581 = vunpack.c.l.s4 1983009808
          %v582 = vunpack.c.0.s8 %v581
          %v583 = vperm.slane %v579, %v582
          %v584 = vrot.slane %v508, 4
          %v585 = vsel %vm457, %v584, %v506
          %v587 = vunpack.c.l.s4 1983009808
          %v588 = vunpack.c.0.s8 %v587
          %v589 = vperm.slane %v585, %v588
          %v590 = vsel %vm457, %v511, %v500
          %v592 = vunpack.c.l.s4 1983009808
          %v593 = vunpack.c.0.s8 %v592
          %v594 = vperm.slane %v590, %v593
          %v595 = vrot.slane %v512, 4
          %v596 = vsel %vm457, %v595, %v510
          %v598 = vunpack.c.l.s4 1983009808
          %v599 = vunpack.c.0.s8 %v598
          %v600 = vperm.slane %v596, %v599
          %v601 = vrot.slane %v589, 4
          %v602 = vsel %vm457, %v601, %v583
          %v603 = vrot.slane %v583, 4
          %v604 = vsel %vm457, %v589, %v603
          %v606 = vunpack.c.l.s4 1934713408
          %v607 = vunpack.c.0.s8 %v606
          %v608 = vperm.slane %v602, %v607
          %v610 = vunpack.c.l.s4 1934713408
          %v611 = vunpack.c.0.s8 %v610
          %v612 = vperm.slane %v604, %v611
          %v613 = vrot.slane %v600, 4
          %v614 = vsel %vm457, %v613, %v594
          %v615 = vrot.slane %v594, 4
          %v616 = vsel %vm457, %v600, %v615
          %v618 = vunpack.c.l.s4 1934713408
          %v619 = vunpack.c.0.s8 %v618
          %v620 = vperm.slane %v614, %v619
          %v622 = vunpack.c.l.s4 1934713408
          %v623 = vunpack.c.0.s8 %v622
          %v624 = vperm.slane %v616, %v623
          %v625 = vrot.slane %v620, 4
          %v626 = vsel %vm457, %v625, %v608
          %v627 = vrot.slane %v608, 4
          %v628 = vsel %vm457, %v620, %v627
          %v629 = vrot.slane %v624, 4
          %v630 = vsel %vm457, %v629, %v612
          %v631 = vrot.slane %v612, 4
          %v632 = vsel %vm457, %v624, %v631
          %vm633 = vcmask 64512
          %634 = vst.msk [vmem:[#allocation2] sm:$0xff] %vm633, %v626
          %635 = vst.msk [vmem:[#allocation2 + $0x8] sm:$0xff] %vm633, %v628
          %636 = vst.msk [vmem:[#allocation2 + $0x10] sm:$0xff] %vm633, %v630
          %637 = vst.msk [vmem:[#allocation2 + $0x18] sm:$0xff] %vm633, %v632
          %v638 = vsel %vm457, %v573, %v554
          %v640 = vunpack.c.l.s4 1983009808
          %v641 = vunpack.c.0.s8 %v640
          %v642 = vperm.slane %v638, %v641
          %v643 = vrot.slane %v574, 4
          %v644 = vsel %vm457, %v643, %v572
          %v646 = vunpack.c.l.s4 1983009808
          %v647 = vunpack.c.0.s8 %v646
          %v648 = vperm.slane %v644, %v647
          %v649 = vsel %vm457, %v577, %v566
          %v651 = vunpack.c.l.s4 1983009808
          %v652 = vunpack.c.0.s8 %v651
          %v653 = vperm.slane %v649, %v652
          %v654 = vrot.slane %v578, 4
          %v655 = vsel %vm457, %v654, %v576
          %v657 = vunpack.c.l.s4 1983009808
          %v658 = vunpack.c.0.s8 %v657
          %v659 = vperm.slane %v655, %v658
          %v660 = vrot.slane %v648, 4
          %v661 = vsel %vm457, %v660, %v642
          %v662 = vrot.slane %v642, 4
          %v663 = vsel %vm457, %v648, %v662
          %v665 = vunpack.c.l.s4 1934713408
          %v666 = vunpack.c.0.s8 %v665
          %v667 = vperm.slane %v661, %v666
          %v669 = vunpack.c.l.s4 1934713408
          %v670 = vunpack.c.0.s8 %v669
          %v671 = vperm.slane %v663, %v670
          %v672 = vrot.slane %v659, 4
          %v673 = vsel %vm457, %v672, %v653
          %v674 = vrot.slane %v653, 4
          %v675 = vsel %vm457, %v659, %v674
          %v677 = vunpack.c.l.s4 1934713408
          %v678 = vunpack.c.0.s8 %v677
          %v679 = vperm.slane %v673, %v678
          %v681 = vunpack.c.l.s4 1934713408
          %v682 = vunpack.c.0.s8 %v681
          %v683 = vperm.slane %v675, %v682
          %v684 = vrot.slane %v679, 4
          %v685 = vsel %vm457, %v684, %v667
          %v686 = vrot.slane %v667, 4
          %v687 = vsel %vm457, %v679, %v686
          %v688 = vrot.slane %v683, 4
          %v689 = vsel %vm457, %v688, %v671
          %v690 = vrot.slane %v671, 4
          %v691 = vsel %vm457, %v683, %v690
          %692 = vst.msk [vmem:[#allocation3] sm:$0xff] %vm633, %v685
          %693 = vst.msk [vmem:[#allocation3 + $0x8] sm:$0xff] %vm633, %v687
          %694 = vst.msk [vmem:[#allocation3 + $0x10] sm:$0xff] %vm633, %v689
          %695 = vst.msk [vmem:[#allocation3 + $0x18] sm:$0xff] %vm633, %v691
        $region68: #{tpu_custom_call.1} parent=43 // pred_fallthru
          _
        %s696 = smul.u32 %s35, 8
        %s697 = scalar_lea.vmem %s332, %s696 [#allocation4]
        %v698 = vld [vmem:[%s697] sm:$0xff]
        %v699 = vld [vmem:[#allocation7] sm:$0xff]
        %v700 = vld [vmem:[#allocation7 + $0x8] sm:$0xff]
        %v701 = vld [vmem:[#allocation7 + $0x10] sm:$0xff]
        %v702 = vld [vmem:[#allocation7 + $0x18] sm:$0xff]
        %vm703 = vcmask 261120
        %v705 = vsel %vm703, %v698, 0
        %707 = vmatpush.msra.mxu0 0.0
        %708 = vmatpush.msra.mxu0 0.0
        %709 = vmatpush.msra.mxu0 0.0
        %710 = vmatpush.msra.mxu0 0.0
        %711 = vmatpush.msra.mxu0 0.0
        %712 = vmatpush.msra.mxu0 0.0
        %713 = vmatpush.msra.mxu0 0.0
        %714 = vmatpush.msra.mxu0 0.0
        %715 = vmatpush.msra.mxu0 0.0
        %716 = vmatpush.msra.mxu0 0.0
        %717 = vmatpush.msra.mxu0 0.0
        %718 = vmatpush.msra.mxu0 0.0
        %719 = vmatpush.msra.mxu0 %v702
        %720 = vmatpush.msra.mxu0 %v701
        %721 = vmatpush.msra.mxu0 %v700
        %722 = vmatpush.msra.mxu0 %v699
        %723 = vmatmul.f32.gmra.mxu0 %v705
        %v724 = vpop.f32.mrf.mxu0
        %v725 = vadd.f32 0.0, %v724
        %726 = vdwg.mxu0
        %728 = vrot.lane.b32.xlu0 %v725, 120
        %v729 = vpop.permute.xlu0 %728
        %730 = vrot.lane.b32.xlu0 %v725, 112
        %v731 = vpop.permute.xlu0 %730
        %732 = vrot.lane.b32.xlu0 %v725, 104
        %v733 = vpop.permute.xlu0 %732
        %v734 = vld [vmem:[#allocation2] sm:$0xff]
        %v735 = vld [vmem:[#allocation2 + $0x8] sm:$0xff]
        %v736 = vld [vmem:[#allocation2 + $0x10] sm:$0xff]
        %v737 = vld [vmem:[#allocation2 + $0x18] sm:$0xff]
        %v738 = vld [vmem:[#allocation3] sm:$0xff]
        %v739 = vld [vmem:[#allocation3 + $0x8] sm:$0xff]
        %v740 = vld [vmem:[#allocation3 + $0x10] sm:$0xff]
        %v741 = vld [vmem:[#allocation3 + $0x18] sm:$0xff]
        %vm742 = vcmask 64512
        %v743 = vsel %vm742, %v725, 0
        %v746 = vsel %vm742, %v734, 0
        %748 = vmatpush.xpose.msra.mxu0 0.0
        %749 = vmatpush.xpose.msra.mxu0 0.0
        %750 = vmatpush.xpose.msra.mxu0 0.0
        %751 = vmatpush.xpose.msra.mxu0 0.0
        %752 = vmatpush.xpose.msra.mxu0 0.0
        %753 = vmatpush.xpose.msra.mxu0 0.0
        %754 = vmatpush.xpose.msra.mxu0 0.0
        %755 = vmatpush.xpose.msra.mxu0 0.0
        %756 = vmatpush.xpose.msra.mxu0 0.0
        %757 = vmatpush.xpose.msra.mxu0 0.0
        %758 = vmatpush.xpose.msra.mxu0 0.0
        %759 = vmatpush.xpose.msra.mxu0 0.0
        %760 = vmatpush.xpose.msra.mxu0 0.0
        %761 = vmatpush.xpose.msra.mxu0 0.0
        %762 = vmatpush.xpose.msra.mxu0 0.0
        %763 = vmatpush.xpose.msra.mxu0 %v746
        %764 = vmatmul.f32.gmra.mxu0 %v743
        %v765 = vpop.f32.mrf.mxu0
        %v766 = vadd.f32 0.0, %v765
        %767 = vdwg.mxu0
        %v768 = vsel %vm742, %v729, 0
        %v771 = vsel %vm742, %v735, 0
        %773 = vmatpush.xpose.msra.mxu0 0.0
        %774 = vmatpush.xpose.msra.mxu0 0.0
        %775 = vmatpush.xpose.msra.mxu0 0.0
        %776 = vmatpush.xpose.msra.mxu0 0.0
        %777 = vmatpush.xpose.msra.mxu0 0.0
        %778 = vmatpush.xpose.msra.mxu0 0.0
        %779 = vmatpush.xpose.msra.mxu0 0.0
        %780 = vmatpush.xpose.msra.mxu0 0.0
        %781 = vmatpush.xpose.msra.mxu0 0.0
        %782 = vmatpush.xpose.msra.mxu0 0.0
        %783 = vmatpush.xpose.msra.mxu0 0.0
        %784 = vmatpush.xpose.msra.mxu0 0.0
        %785 = vmatpush.xpose.msra.mxu0 0.0
        %786 = vmatpush.xpose.msra.mxu0 0.0
        %787 = vmatpush.xpose.msra.mxu0 0.0
        %788 = vmatpush.xpose.msra.mxu0 %v771
        %789 = vmatmul.f32.gmra.mxu0 %v768
        %v790 = vpop.f32.mrf.mxu0
        %v791 = vadd.f32 0.0, %v790
        %792 = vdwg.mxu0
        %v793 = vsel %vm742, %v731, 0
        %v796 = vsel %vm742, %v736, 0
        %798 = vmatpush.xpose.msra.mxu0 0.0
        %799 = vmatpush.xpose.msra.mxu0 0.0
        %800 = vmatpush.xpose.msra.mxu0 0.0
        %801 = vmatpush.xpose.msra.mxu0 0.0
        %802 = vmatpush.xpose.msra.mxu0 0.0
        %803 = vmatpush.xpose.msra.mxu0 0.0
        %804 = vmatpush.xpose.msra.mxu0 0.0
        %805 = vmatpush.xpose.msra.mxu0 0.0
        %806 = vmatpush.xpose.msra.mxu0 0.0
        %807 = vmatpush.xpose.msra.mxu0 0.0
        %808 = vmatpush.xpose.msra.mxu0 0.0
        %809 = vmatpush.xpose.msra.mxu0 0.0
        %810 = vmatpush.xpose.msra.mxu0 0.0
        %811 = vmatpush.xpose.msra.mxu0 0.0
        %812 = vmatpush.xpose.msra.mxu0 0.0
        %813 = vmatpush.xpose.msra.mxu0 %v796
        %814 = vmatmul.f32.gmra.mxu0 %v793
        %v815 = vpop.f32.mrf.mxu0
        %v816 = vadd.f32 0.0, %v815
        %817 = vdwg.mxu0
        %v818 = vsel %vm742, %v733, 0
        %v821 = vsel %vm742, %v737, 0
        %823 = vmatpush.xpose.msra.mxu0 0.0
        %824 = vmatpush.xpose.msra.mxu0 0.0
        %825 = vmatpush.xpose.msra.mxu0 0.0
        %826 = vmatpush.xpose.msra.mxu0 0.0
        %827 = vmatpush.xpose.msra.mxu0 0.0
        %828 = vmatpush.xpose.msra.mxu0 0.0
        %829 = vmatpush.xpose.msra.mxu0 0.0
        %830 = vmatpush.xpose.msra.mxu0 0.0
        %831 = vmatpush.xpose.msra.mxu0 0.0
        %832 = vmatpush.xpose.msra.mxu0 0.0
        %833 = vmatpush.xpose.msra.mxu0 0.0
        %834 = vmatpush.xpose.msra.mxu0 0.0
        %835 = vmatpush.xpose.msra.mxu0 0.0
        %836 = vmatpush.xpose.msra.mxu0 0.0
        %837 = vmatpush.xpose.msra.mxu0 0.0
        %838 = vmatpush.xpose.msra.mxu0 %v821
        %839 = vmatmul.f32.gmra.mxu0 %v818
        %v840 = vpop.f32.mrf.mxu0
        %v841 = vadd.f32 0.0, %v840
        %842 = vdwg.mxu0
        %v843 = vsel %vm742, %v766, -inf
        %844 = vmax.xlane.f32.xlu0 %v843
        %v845 = vpop.xlane.xlu0 %844
        %v846 = vsel %vm742, %v791, -inf
        %847 = vmax.xlane.f32.xlu0 %v846
        %v848 = vpop.xlane.xlu0 %847
        %v849 = vsel %vm742, %v816, -inf
        %850 = vmax.xlane.f32.xlu0 %v849
        %v851 = vpop.xlane.xlu0 %850
        %v852 = vsel %vm742, %v841, -inf
        %853 = vmax.xlane.f32.xlu0 %v852
        %v854 = vpop.xlane.xlu0 %853
        %v855 = vsub.f32 %v766, %v845
        %v856 = vsub.f32 %v791, %v848
        %v857 = vsub.f32 %v816, %v851
        %v858 = vsub.f32 %v841, %v854
        %v859 = vmul.f32 %v855, 1.442695
        %v860 = vpow.pop %v859
        %v861 = vmul.f32 %v856, 1.442695
        %v862 = vpow.pop %v861
        %v863 = vmul.f32 %v857, 1.442695
        %v864 = vpow.pop %v863
        %v865 = vmul.f32 %v858, 1.442695
        %v866 = vpow.pop %v865
        %v867 = vsel %vm742, %v860, 0.0
        %868 = vadd.xlane.f32.xlu0 %v867
        %v869 = vpop.xlane.xlu0 %868
        %v870 = vsel %vm742, %v862, 0.0
        %871 = vadd.xlane.f32.xlu0 %v870
        %v872 = vpop.xlane.xlu0 %871
        %v873 = vsel %vm742, %v864, 0.0
        %874 = vadd.xlane.f32.xlu0 %v873
        %v875 = vpop.xlane.xlu0 %874
        %v876 = vsel %vm742, %v866, 0.0
        %877 = vadd.xlane.f32.xlu0 %v876
        %v878 = vpop.xlane.xlu0 %877
        %v879 = vrcp.pop %v869
        %v880 = vrcp.pop %v872
        %v881 = vrcp.pop %v875
        %v882 = vrcp.pop %v878
        %v883 = vmul.f32 %v860, %v879
        %v884 = vmul.f32 %v862, %v880
        %v885 = vmul.f32 %v864, %v881
        %v886 = vmul.f32 %v866, %v882
        %887 = vst.msk [vmem:[%s388] sm:$0xff] %vm742, %v883
        %888 = vst.msk [vmem:[%s388 + $0x8] sm:$0xff] %vm742, %v884
        %889 = vst.msk [vmem:[%s388 + $0x10] sm:$0xff] %vm742, %v885
        %890 = vst.msk [vmem:[%s388 + $0x18] sm:$0xff] %vm742, %v886
        %891 = vxpose.xlu0.b32.start [1/16] %v738, 128
        %892 = vxpose.xlu0.b32.cont [2/16] 0.0, 128
        %893 = vxpose.xlu0.b32.cont [3/16] 0.0, 128
        %894 = vxpose.xlu0.b32.cont [4/16] 0.0, 128
        %895 = vxpose.xlu0.b32.cont [5/16] 0.0, 128
        %896 = vxpose.xlu0.b32.cont [6/16] 0.0, 128
        %897 = vxpose.xlu0.b32.cont [7/16] 0.0, 128
        %898 = vxpose.xlu0.b32.cont [8/16] 0.0, 128
        %899 = vxpose.xlu0.b32.cont [9/16] 0.0, 128
        %900 = vxpose.xlu0.b32.cont [10/16] 0.0, 128
        %901 = vxpose.xlu0.b32.cont [11/16] 0.0, 128
        %902 = vxpose.xlu0.b32.cont [12/16] 0.0, 128
        %903 = vxpose.xlu0.b32.cont [13/16] 0.0, 128
        %904 = vxpose.xlu0.b32.cont [14/16] 0.0, 128
        %905 = vxpose.xlu0.b32.cont [15/16] 0.0, 128
        %906 = vxpose.xlu0.b32.end [16/16] 0.0, 128
        %v907 = vpop.trf.xlu0
        %v908 = vpop.trf.xlu0
        %v909 = vpop.trf.xlu0
        %v910 = vpop.trf.xlu0
        %v911 = vpop.trf.xlu0
        %v912 = vpop.trf.xlu0
        %v913 = vpop.trf.xlu0
        %v914 = vpop.trf.xlu0
        %v915 = vpop.trf.xlu0
        %v916 = vpop.trf.xlu0
        %v917 = vpop.trf.xlu0
        %v918 = vpop.trf.xlu0
        %v919 = vpop.trf.xlu0
        %v920 = vpop.trf.xlu0
        %v921 = vpop.trf.xlu0
        %v922 = vpop.trf.xlu0
        %v924 = vsel %vm742, %v907, 0
        %v927 = vsel %vm742, %v883, 0
        %929 = vmatpush.xpose.msra.mxu0 0.0
        %930 = vmatpush.xpose.msra.mxu0 0.0
        %931 = vmatpush.xpose.msra.mxu0 0.0
        %932 = vmatpush.xpose.msra.mxu0 0.0
        %933 = vmatpush.xpose.msra.mxu0 0.0
        %934 = vmatpush.xpose.msra.mxu0 0.0
        %935 = vmatpush.xpose.msra.mxu0 0.0
        %936 = vmatpush.xpose.msra.mxu0 0.0
        %937 = vmatpush.xpose.msra.mxu0 0.0
        %938 = vmatpush.xpose.msra.mxu0 0.0
        %939 = vmatpush.xpose.msra.mxu0 0.0
        %940 = vmatpush.xpose.msra.mxu0 0.0
        %941 = vmatpush.xpose.msra.mxu0 0.0
        %942 = vmatpush.xpose.msra.mxu0 0.0
        %943 = vmatpush.xpose.msra.mxu0 0.0
        %944 = vmatpush.xpose.msra.mxu0 %v927
        %945 = vmatmul.f32.gmra.mxu0 %v924
        %v946 = vpop.f32.mrf.mxu0
        %v947 = vadd.f32 0.0, %v946
        %948 = vdwg.mxu0
        %949 = vxpose.xlu0.b32.start [1/16] %v739, 128
        %950 = vxpose.xlu0.b32.cont [2/16] 0.0, 128
        %951 = vxpose.xlu0.b32.cont [3/16] 0.0, 128
        %952 = vxpose.xlu0.b32.cont [4/16] 0.0, 128
        %953 = vxpose.xlu0.b32.cont [5/16] 0.0, 128
        %954 = vxpose.xlu0.b32.cont [6/16] 0.0, 128
        %955 = vxpose.xlu0.b32.cont [7/16] 0.0, 128
        %956 = vxpose.xlu0.b32.cont [8/16] 0.0, 128
        %957 = vxpose.xlu0.b32.cont [9/16] 0.0, 128
        %958 = vxpose.xlu0.b32.cont [10/16] 0.0, 128
        %959 = vxpose.xlu0.b32.cont [11/16] 0.0, 128
        %960 = vxpose.xlu0.b32.cont [12/16] 0.0, 128
        %961 = vxpose.xlu0.b32.cont [13/16] 0.0, 128
        %962 = vxpose.xlu0.b32.cont [14/16] 0.0, 128
        %963 = vxpose.xlu0.b32.cont [15/16] 0.0, 128
        %964 = vxpose.xlu0.b32.end [16/16] 0.0, 128
        %v965 = vpop.trf.xlu0
        %v966 = vpop.trf.xlu0
        %v967 = vpop.trf.xlu0
        %v968 = vpop.trf.xlu0
        %v969 = vpop.trf.xlu0
        %v970 = vpop.trf.xlu0
        %v971 = vpop.trf.xlu0
        %v972 = vpop.trf.xlu0
        %v973 = vpop.trf.xlu0
        %v974 = vpop.trf.xlu0
        %v975 = vpop.trf.xlu0
        %v976 = vpop.trf.xlu0
        %v977 = vpop.trf.xlu0
        %v978 = vpop.trf.xlu0
        %v979 = vpop.trf.xlu0
        %v980 = vpop.trf.xlu0
        %v982 = vsel %vm742, %v965, 0
        %v985 = vsel %vm742, %v884, 0
        %987 = vmatpush.xpose.msra.mxu0 0.0
        %988 = vmatpush.xpose.msra.mxu0 0.0
        %989 = vmatpush.xpose.msra.mxu0 0.0
        %990 = vmatpush.xpose.msra.mxu0 0.0
        %991 = vmatpush.xpose.msra.mxu0 0.0
        %992 = vmatpush.xpose.msra.mxu0 0.0
        %993 = vmatpush.xpose.msra.mxu0 0.0
        %994 = vmatpush.xpose.msra.mxu0 0.0
        %995 = vmatpush.xpose.msra.mxu0 0.0
        %996 = vmatpush.xpose.msra.mxu0 0.0
        %997 = vmatpush.xpose.msra.mxu0 0.0
        %998 = vmatpush.xpose.msra.mxu0 0.0
        %999 = vmatpush.xpose.msra.mxu0 0.0
        %1000 = vmatpush.xpose.msra.mxu0 0.0
        %1001 = vmatpush.xpose.msra.mxu0 0.0
        %1002 = vmatpush.xpose.msra.mxu0 %v985
        %1003 = vmatmul.f32.gmra.mxu0 %v982
        %v1004 = vpop.f32.mrf.mxu0
        %v1005 = vadd.f32 0.0, %v1004
        %1006 = vdwg.mxu0
        %1007 = vxpose.xlu0.b32.start [1/16] %v740, 128
        %1008 = vxpose.xlu0.b32.cont [2/16] 0.0, 128
        %1009 = vxpose.xlu0.b32.cont [3/16] 0.0, 128
        %1010 = vxpose.xlu0.b32.cont [4/16] 0.0, 128
        %1011 = vxpose.xlu0.b32.cont [5/16] 0.0, 128
        %1012 = vxpose.xlu0.b32.cont [6/16] 0.0, 128
        %1013 = vxpose.xlu0.b32.cont [7/16] 0.0, 128
        %1014 = vxpose.xlu0.b32.cont [8/16] 0.0, 128
        %1015 = vxpose.xlu0.b32.cont [9/16] 0.0, 128
        %1016 = vxpose.xlu0.b32.cont [10/16] 0.0, 128
        %1017 = vxpose.xlu0.b32.cont [11/16] 0.0, 128
        %1018 = vxpose.xlu0.b32.cont [12/16] 0.0, 128
        %1019 = vxpose.xlu0.b32.cont [13/16] 0.0, 128
        %1020 = vxpose.xlu0.b32.cont [14/16] 0.0, 128
        %1021 = vxpose.xlu0.b32.cont [15/16] 0.0, 128
        %1022 = vxpose.xlu0.b32.end [16/16] 0.0, 128
        %v1023 = vpop.trf.xlu0
        %v1024 = vpop.trf.xlu0
        %v1025 = vpop.trf.xlu0
        %v1026 = vpop.trf.xlu0
        %v1027 = vpop.trf.xlu0
        %v1028 = vpop.trf.xlu0
        %v1029 = vpop.trf.xlu0
        %v1030 = vpop.trf.xlu0
        %v1031 = vpop.trf.xlu0
        %v1032 = vpop.trf.xlu0
        %v1033 = vpop.trf.xlu0
        %v1034 = vpop.trf.xlu0
        %v1035 = vpop.trf.xlu0
        %v1036 = vpop.trf.xlu0
        %v1037 = vpop.trf.xlu0
        %v1038 = vpop.trf.xlu0
        %v1040 = vsel %vm742, %v1023, 0
        %v1043 = vsel %vm742, %v885, 0
        %1045 = vmatpush.xpose.msra.mxu0 0.0
        %1046 = vmatpush.xpose.msra.mxu0 0.0
        %1047 = vmatpush.xpose.msra.mxu0 0.0
        %1048 = vmatpush.xpose.msra.mxu0 0.0
        %1049 = vmatpush.xpose.msra.mxu0 0.0
        %1050 = vmatpush.xpose.msra.mxu0 0.0
        %1051 = vmatpush.xpose.msra.mxu0 0.0
        %1052 = vmatpush.xpose.msra.mxu0 0.0
        %1053 = vmatpush.xpose.msra.mxu0 0.0
        %1054 = vmatpush.xpose.msra.mxu0 0.0
        %1055 = vmatpush.xpose.msra.mxu0 0.0
        %1056 = vmatpush.xpose.msra.mxu0 0.0
        %1057 = vmatpush.xpose.msra.mxu0 0.0
        %1058 = vmatpush.xpose.msra.mxu0 0.0
        %1059 = vmatpush.xpose.msra.mxu0 0.0
        %1060 = vmatpush.xpose.msra.mxu0 %v1043
        %1061 = vmatmul.f32.gmra.mxu0 %v1040
        %v1062 = vpop.f32.mrf.mxu0
        %v1063 = vadd.f32 0.0, %v1062
        %1064 = vdwg.mxu0
        %1065 = vxpose.xlu0.b32.start [1/16] %v741, 128
        %1066 = vxpose.xlu0.b32.cont [2/16] 0.0, 128
        %1067 = vxpose.xlu0.b32.cont [3/16] 0.0, 128
        %1068 = vxpose.xlu0.b32.cont [4/16] 0.0, 128
        %1069 = vxpose.xlu0.b32.cont [5/16] 0.0, 128
        %1070 = vxpose.xlu0.b32.cont [6/16] 0.0, 128
        %1071 = vxpose.xlu0.b32.cont [7/16] 0.0, 128
        %1072 = vxpose.xlu0.b32.cont [8/16] 0.0, 128
        %1073 = vxpose.xlu0.b32.cont [9/16] 0.0, 128
        %1074 = vxpose.xlu0.b32.cont [10/16] 0.0, 128
        %1075 = vxpose.xlu0.b32.cont [11/16] 0.0, 128
        %1076 = vxpose.xlu0.b32.cont [12/16] 0.0, 128
        %1077 = vxpose.xlu0.b32.cont [13/16] 0.0, 128
        %1078 = vxpose.xlu0.b32.cont [14/16] 0.0, 128
        %1079 = vxpose.xlu0.b32.cont [15/16] 0.0, 128
        %1080 = vxpose.xlu0.b32.end [16/16] 0.0, 128
        %v1081 = vpop.trf.xlu0
        %v1082 = vpop.trf.xlu0
        %v1083 = vpop.trf.xlu0
        %v1084 = vpop.trf.xlu0
        %v1085 = vpop.trf.xlu0
        %v1086 = vpop.trf.xlu0
        %v1087 = vpop.trf.xlu0
        %v1088 = vpop.trf.xlu0
        %v1089 = vpop.trf.xlu0
        %v1090 = vpop.trf.xlu0
        %v1091 = vpop.trf.xlu0
        %v1092 = vpop.trf.xlu0
        %v1093 = vpop.trf.xlu0
        %v1094 = vpop.trf.xlu0
        %v1095 = vpop.trf.xlu0
        %v1096 = vpop.trf.xlu0
        %v1098 = vsel %vm742, %v1081, 0
        %v1101 = vsel %vm742, %v886, 0
        %1103 = vmatpush.xpose.msra.mxu0 0.0
        %1104 = vmatpush.xpose.msra.mxu0 0.0
        %1105 = vmatpush.xpose.msra.mxu0 0.0
        %1106 = vmatpush.xpose.msra.mxu0 0.0
        %1107 = vmatpush.xpose.msra.mxu0 0.0
        %1108 = vmatpush.xpose.msra.mxu0 0.0
        %1109 = vmatpush.xpose.msra.mxu0 0.0
        %1110 = vmatpush.xpose.msra.mxu0 0.0
        %1111 = vmatpush.xpose.msra.mxu0 0.0
        %1112 = vmatpush.xpose.msra.mxu0 0.0
        %1113 = vmatpush.xpose.msra.mxu0 0.0
        %1114 = vmatpush.xpose.msra.mxu0 0.0
        %1115 = vmatpush.xpose.msra.mxu0 0.0
        %1116 = vmatpush.xpose.msra.mxu0 0.0
        %1117 = vmatpush.xpose.msra.mxu0 0.0
        %1118 = vmatpush.xpose.msra.mxu0 %v1101
        %1119 = vmatmul.f32.gmra.mxu0 %v1098
        %v1120 = vpop.f32.mrf.mxu0
        %v1121 = vadd.f32 0.0, %v1120
        %1122 = vdwg.mxu0
        %1123 = vxpose.xlu0.b32.start [1/16] %v947, 128
        %1124 = vxpose.xlu0.b32.cont [2/16] 0.0, 128
        %1125 = vxpose.xlu0.b32.cont [3/16] 0.0, 128
        %1126 = vxpose.xlu0.b32.cont [4/16] 0.0, 128
        %1127 = vxpose.xlu0.b32.cont [5/16] 0.0, 128
        %1128 = vxpose.xlu0.b32.cont [6/16] 0.0, 128
        %1129 = vxpose.xlu0.b32.cont [7/16] 0.0, 128
        %1130 = vxpose.xlu0.b32.cont [8/16] 0.0, 128
        %1131 = vxpose.xlu0.b32.cont [9/16] 0.0, 128
        %1132 = vxpose.xlu0.b32.cont [10/16] 0.0, 128
        %1133 = vxpose.xlu0.b32.cont [11/16] 0.0, 128
        %1134 = vxpose.xlu0.b32.cont [12/16] 0.0, 128
        %1135 = vxpose.xlu0.b32.cont [13/16] 0.0, 128
        %1136 = vxpose.xlu0.b32.cont [14/16] 0.0, 128
        %1137 = vxpose.xlu0.b32.cont [15/16] 0.0, 128
        %1138 = vxpose.xlu0.b32.end [16/16] 0.0, 128
        %v1139 = vpop.trf.xlu0
        %v1140 = vpop.trf.xlu0
        %v1141 = vpop.trf.xlu0
        %v1142 = vpop.trf.xlu0
        %v1143 = vpop.trf.xlu0
        %v1144 = vpop.trf.xlu0
        %v1145 = vpop.trf.xlu0
        %v1146 = vpop.trf.xlu0
        %v1147 = vpop.trf.xlu0
        %v1148 = vpop.trf.xlu0
        %v1149 = vpop.trf.xlu0
        %v1150 = vpop.trf.xlu0
        %v1151 = vpop.trf.xlu0
        %v1152 = vpop.trf.xlu0
        %v1153 = vpop.trf.xlu0
        %v1154 = vpop.trf.xlu0
        %1155 = vxpose.xlu0.b32.start [1/16] %v1005, 128
        %1156 = vxpose.xlu0.b32.cont [2/16] 0.0, 128
        %1157 = vxpose.xlu0.b32.cont [3/16] 0.0, 128
        %1158 = vxpose.xlu0.b32.cont [4/16] 0.0, 128
        %1159 = vxpose.xlu0.b32.cont [5/16] 0.0, 128
        %1160 = vxpose.xlu0.b32.cont [6/16] 0.0, 128
        %1161 = vxpose.xlu0.b32.cont [7/16] 0.0, 128
        %1162 = vxpose.xlu0.b32.cont [8/16] 0.0, 128
        %1163 = vxpose.xlu0.b32.cont [9/16] 0.0, 128
        %1164 = vxpose.xlu0.b32.cont [10/16] 0.0, 128
        %1165 = vxpose.xlu0.b32.cont [11/16] 0.0, 128
        %1166 = vxpose.xlu0.b32.cont [12/16] 0.0, 128
        %1167 = vxpose.xlu0.b32.cont [13/16] 0.0, 128
        %1168 = vxpose.xlu0.b32.cont [14/16] 0.0, 128
        %1169 = vxpose.xlu0.b32.cont [15/16] 0.0, 128
        %1170 = vxpose.xlu0.b32.end [16/16] 0.0, 128
        %v1171 = vpop.trf.xlu0
        %v1172 = vpop.trf.xlu0
        %v1173 = vpop.trf.xlu0
        %v1174 = vpop.trf.xlu0
        %v1175 = vpop.trf.xlu0
        %v1176 = vpop.trf.xlu0
        %v1177 = vpop.trf.xlu0
        %v1178 = vpop.trf.xlu0
        %v1179 = vpop.trf.xlu0
        %v1180 = vpop.trf.xlu0
        %v1181 = vpop.trf.xlu0
        %v1182 = vpop.trf.xlu0
        %v1183 = vpop.trf.xlu0
        %v1184 = vpop.trf.xlu0
        %v1185 = vpop.trf.xlu0
        %v1186 = vpop.trf.xlu0
        %1187 = vxpose.xlu0.b32.start [1/16] %v1063, 128
        %1188 = vxpose.xlu0.b32.cont [2/16] 0.0, 128
        %1189 = vxpose.xlu0.b32.cont [3/16] 0.0, 128
        %1190 = vxpose.xlu0.b32.cont [4/16] 0.0, 128
        %1191 = vxpose.xlu0.b32.cont [5/16] 0.0, 128
        %1192 = vxpose.xlu0.b32.cont [6/16] 0.0, 128
        %1193 = vxpose.xlu0.b32.cont [7/16] 0.0, 128
        %1194 = vxpose.xlu0.b32.cont [8/16] 0.0, 128
        %1195 = vxpose.xlu0.b32.cont [9/16] 0.0, 128
        %1196 = vxpose.xlu0.b32.cont [10/16] 0.0, 128
        %1197 = vxpose.xlu0.b32.cont [11/16] 0.0, 128
        %1198 = vxpose.xlu0.b32.cont [12/16] 0.0, 128
        %1199 = vxpose.xlu0.b32.cont [13/16] 0.0, 128
        %1200 = vxpose.xlu0.b32.cont [14/16] 0.0, 128
        %1201 = vxpose.xlu0.b32.cont [15/16] 0.0, 128
        %1202 = vxpose.xlu0.b32.end [16/16] 0.0, 128
        %v1203 = vpop.trf.xlu0
        %v1204 = vpop.trf.xlu0
        %v1205 = vpop.trf.xlu0
        %v1206 = vpop.trf.xlu0
        %v1207 = vpop.trf.xlu0
        %v1208 = vpop.trf.xlu0
        %v1209 = vpop.trf.xlu0
        %v1210 = vpop.trf.xlu0
        %v1211 = vpop.trf.xlu0
        %v1212 = vpop.trf.xlu0
        %v1213 = vpop.trf.xlu0
        %v1214 = vpop.trf.xlu0
        %v1215 = vpop.trf.xlu0
        %v1216 = vpop.trf.xlu0
        %v1217 = vpop.trf.xlu0
        %v1218 = vpop.trf.xlu0
        %1219 = vxpose.xlu0.b32.start [1/16] %v1121, 128
        %1220 = vxpose.xlu0.b32.cont [2/16] 0.0, 128
        %1221 = vxpose.xlu0.b32.cont [3/16] 0.0, 128
        %1222 = vxpose.xlu0.b32.cont [4/16] 0.0, 128
        %1223 = vxpose.xlu0.b32.cont [5/16] 0.0, 128
        %1224 = vxpose.xlu0.b32.cont [6/16] 0.0, 128
        %1225 = vxpose.xlu0.b32.cont [7/16] 0.0, 128
        %1226 = vxpose.xlu0.b32.cont [8/16] 0.0, 128
        %1227 = vxpose.xlu0.b32.cont [9/16] 0.0, 128
        %1228 = vxpose.xlu0.b32.cont [10/16] 0.0, 128
        %1229 = vxpose.xlu0.b32.cont [11/16] 0.0, 128
        %1230 = vxpose.xlu0.b32.cont [12/16] 0.0, 128
        %1231 = vxpose.xlu0.b32.cont [13/16] 0.0, 128
        %1232 = vxpose.xlu0.b32.cont [14/16] 0.0, 128
        %1233 = vxpose.xlu0.b32.cont [15/16] 0.0, 128
        %1234 = vxpose.xlu0.b32.end [16/16] 0.0, 128
        %v1235 = vpop.trf.xlu0
        %v1236 = vpop.trf.xlu0
        %v1237 = vpop.trf.xlu0
        %v1238 = vpop.trf.xlu0
        %v1239 = vpop.trf.xlu0
        %v1240 = vpop.trf.xlu0
        %v1241 = vpop.trf.xlu0
        %v1242 = vpop.trf.xlu0
        %v1243 = vpop.trf.xlu0
        %v1244 = vpop.trf.xlu0
        %v1245 = vpop.trf.xlu0
        %v1246 = vpop.trf.xlu0
        %v1247 = vpop.trf.xlu0
        %v1248 = vpop.trf.xlu0
        %v1249 = vpop.trf.xlu0
        %v1250 = vpop.trf.xlu0
        %v1251 = vrot.slane %v1203, 4
        %vm1252 = vcmask 1047556
        %v1253 = vsel %vm1252, %v1251, %v1139
        %v1254 = vrot.slane %v1139, 4
        %v1255 = vsel %vm1252, %v1203, %v1254
        %v1257 = vunpack.c.l.s4 1983009808
        %v1258 = vunpack.c.0.s8 %v1257
        %v1259 = vperm.slane %v1253, %v1258
        %v1261 = vunpack.c.l.s4 1983009808
        %v1262 = vunpack.c.0.s8 %v1261
        %v1263 = vperm.slane %v1255, %v1262
        %v1264 = vrot.slane %v1235, 4
        %v1265 = vsel %vm1252, %v1264, %v1171
        %v1266 = vrot.slane %v1171, 4
        %v1267 = vsel %vm1252, %v1235, %v1266
        %v1269 = vunpack.c.l.s4 1983009808
        %v1270 = vunpack.c.0.s8 %v1269
        %v1271 = vperm.slane %v1265, %v1270
        %v1273 = vunpack.c.l.s4 1983009808
        %v1274 = vunpack.c.0.s8 %v1273
        %v1275 = vperm.slane %v1267, %v1274
        %v1276 = vrot.slane %v1271, 4
        %v1277 = vsel %vm1252, %v1276, %v1259
        %v1278 = vrot.slane %v1259, 4
        %v1279 = vsel %vm1252, %v1271, %v1278
        %v1281 = vunpack.c.l.s4 1934713408
        %v1282 = vunpack.c.0.s8 %v1281
        %v1283 = vperm.slane %v1277, %v1282
        %v1285 = vunpack.c.l.s4 1934713408
        %v1286 = vunpack.c.0.s8 %v1285
        %v1287 = vperm.slane %v1279, %v1286
        %v1288 = vrot.slane %v1275, 4
        %v1289 = vsel %vm1252, %v1288, %v1263
        %v1290 = vrot.slane %v1263, 4
        %v1291 = vsel %vm1252, %v1275, %v1290
        %v1293 = vunpack.c.l.s4 1934713408
        %v1294 = vunpack.c.0.s8 %v1293
        %v1295 = vperm.slane %v1289, %v1294
        %v1297 = vunpack.c.l.s4 1934713408
        %v1298 = vunpack.c.0.s8 %v1297
        %v1299 = vperm.slane %v1291, %v1298
        %v1300 = vrot.slane %v1283, 4
        %v1301 = vsel %vm1252, 0.0, %v1300
        %v1302 = vrot.slane %v1287, 4
        %v1303 = vsel %vm1252, 0.0, %v1302
        %v1304 = vrot.slane %v1295, 4
        %v1305 = vsel %vm1252, 0.0, %v1304
        %v1306 = vrot.slane %v1299, 4
        %v1307 = vsel %vm1252, 0.0, %v1306
        %v1308 = vsel %vm1252, %v1302, %v1283
        %v1310 = vunpack.c.l.s4 1983009808
        %v1311 = vunpack.c.0.s8 %v1310
        %v1312 = vperm.slane %v1308, %v1311
        %v1313 = vrot.slane %v1303, 4
        %v1314 = vsel %vm1252, %v1313, %v1301
        %v1316 = vunpack.c.l.s4 1983009808
        %v1317 = vunpack.c.0.s8 %v1316
        %v1318 = vperm.slane %v1314, %v1317
        %v1319 = vsel %vm1252, %v1306, %v1295
        %v1321 = vunpack.c.l.s4 1983009808
        %v1322 = vunpack.c.0.s8 %v1321
        %v1323 = vperm.slane %v1319, %v1322
        %v1324 = vrot.slane %v1307, 4
        %v1325 = vsel %vm1252, %v1324, %v1305
        %v1327 = vunpack.c.l.s4 1983009808
        %v1328 = vunpack.c.0.s8 %v1327
        %v1329 = vperm.slane %v1325, %v1328
        %v1330 = vrot.slane %v1318, 4
        %v1331 = vsel %vm1252, %v1330, %v1312
        %v1332 = vrot.slane %v1312, 4
        %v1333 = vsel %vm1252, %v1318, %v1332
        %v1335 = vunpack.c.l.s4 1934713408
        %v1336 = vunpack.c.0.s8 %v1335
        %v1337 = vperm.slane %v1331, %v1336
        %v1339 = vunpack.c.l.s4 1934713408
        %v1340 = vunpack.c.0.s8 %v1339
        %v1341 = vperm.slane %v1333, %v1340
        %v1342 = vrot.slane %v1329, 4
        %v1343 = vsel %vm1252, %v1342, %v1323
        %v1344 = vrot.slane %v1323, 4
        %v1345 = vsel %vm1252, %v1329, %v1344
        %v1347 = vunpack.c.l.s4 1934713408
        %v1348 = vunpack.c.0.s8 %v1347
        %v1349 = vperm.slane %v1343, %v1348
        %v1351 = vunpack.c.l.s4 1934713408
        %v1352 = vunpack.c.0.s8 %v1351
        %v1353 = vperm.slane %v1345, %v1352
        %v1354 = vrot.slane %v1349, 4
        %v1355 = vsel %vm1252, %v1354, %v1337
        %v1356 = vrot.slane %v1337, 4
        %v1357 = vsel %vm1252, %v1349, %v1356
        %v1358 = vrot.slane %v1353, 4
        %v1359 = vsel %vm1252, %v1358, %v1341
        %v1360 = vrot.slane %v1341, 4
        %v1361 = vsel %vm1252, %v1353, %v1360
        %1363 = vrot.lane.b32.xlu0 %v1357, 8
        %v1364 = vpop.permute.xlu0 %1363
        %1367 = vrot.lane.b32.xlu0 %v1359, 16
        %v1368 = vpop.permute.xlu0 %1367
        %1371 = vrot.lane.b32.xlu0 %v1361, 24
        %v1372 = vpop.permute.xlu0 %1371
        %v1374 = vsel %vm742, %v1355, %v1364
        %vm1375 = vcmask 130048
        %v1376 = vsel %vm1375, %v1374, %v1368
        %vm1377 = vcmask 195584
        %v1378 = vsel %vm1377, %v1376, %v1372
        %v1379 = vld [vmem:[#allocation12] sm:$0xff]
        %v1380 = vld [vmem:[#allocation12 + $0x8] sm:$0xff]
        %v1381 = vld [vmem:[#allocation12 + $0x10] sm:$0xff]
        %v1382 = vld [vmem:[#allocation12 + $0x18] sm:$0xff]
        %v1383 = vld [vmem:[%s5] sm:$0x1]
        %v1385 = vperm.slane %v1383, 0
        %v1388 = vsel %vm703, %v1378, 0
        %1390 = vmatpush.msra.mxu0 0.0
        %1391 = vmatpush.msra.mxu0 0.0
        %1392 = vmatpush.msra.mxu0 0.0
        %1393 = vmatpush.msra.mxu0 0.0
        %1394 = vmatpush.msra.mxu0 0.0
        %1395 = vmatpush.msra.mxu0 0.0
        %1396 = vmatpush.msra.mxu0 0.0
        %1397 = vmatpush.msra.mxu0 0.0
        %1398 = vmatpush.msra.mxu0 0.0
        %1399 = vmatpush.msra.mxu0 0.0
        %1400 = vmatpush.msra.mxu0 0.0
        %1401 = vmatpush.msra.mxu0 0.0
        %1402 = vmatpush.msra.mxu0 %v1382
        %1403 = vmatpush.msra.mxu0 %v1381
        %1404 = vmatpush.msra.mxu0 %v1380
        %1405 = vmatpush.msra.mxu0 %v1379
        %1406 = vmatmul.f32.gmra.mxu0 %v1388
        %v1407 = vpop.f32.mrf.mxu0
        %v1408 = vadd.f32 %v1385, %v1407
        %1409 = vdwg.mxu0
        %1410 = vst.msk [vmem:[%s381] sm:$0xff] %vm703, %v1408
        %s1411 = sand.u32 %s183, 1
        %s1412 = scalar_lea.sflag [#allocation6], %s1411
        %s1413 = sand.u32 %s183, 1
        %s1414 = smul.addr %s1413, 8
        %s1415 = scalar_lea.vmem [#allocation13], %s1414
        %s1416 = sand.u32 %s211, 1
        %s1417 = scalar_lea.sflag [#allocation15], %s1416
        %s1418 = sand.u32 %s211, 1
        %s1419 = smul.addr %s1418, 32
        %s1420 = scalar_lea.vmem [#allocation14], %s1419
        // Predicated region
        $region69: #{tpu_custom_call.1} parent=43 // pred_check
          %p1421 = pneg %p193
        $region70: #{tpu_custom_call.1} parent=43 // pred_check_branch
          %1423 = sbr.rel (%p1421) target = $region72
        $region71: #{tpu_custom_call.1} parent=43 // pred_region
          %1425 = vsyncadd %s1412, 0
          %s1426 = sadd.s32 %s35, %s34
          %s1427 = smul.addr %s1426, 8
          %s1428 = scalar_lea.hbm %s6, %s1427
          %s1430 = sshll.u32 %s1415, 4
          %s1431 = int_to_ptr.vmem [resolvable:$true] %s1430
          %s1432 = sshll.u32 %s1428, 4
          %s1433 = int_to_ptr.hbm [resolvable:$true] %s1432
          %1435 = dma.vmem_to_hbm [thread:$0]  %s1431, 128, %s1433, %s1412
        $region72: #{tpu_custom_call.1} parent=43 // pred_fallthru
          _
        // Predicated region
        $region73: #{tpu_custom_call.1} parent=43 // pred_check
          %p1436 = pneg %p221
        $region74: #{tpu_custom_call.1} parent=43 // pred_check_branch
          %1438 = sbr.rel (%p1436) target = $region76
        $region75: #{tpu_custom_call.1} parent=43 // pred_region
          %1440 = vsyncadd %s1417, 0
          %s1441 = smul.addr %s34, 4
          %s1442 = sadd.s32 %s35, %s1441
          %s1443 = smul.addr %s1442, 8
          %s1444 = scalar_lea.hbm %s7, %s1443
          %s1445 = sshll.u32 %s1420, 4
          %s1446 = int_to_ptr.vmem [resolvable:$true] %s1445
          %s1447 = sshll.u32 %s1444, 4
          %s1448 = int_to_ptr.hbm [resolvable:$true] %s1447
          %1453 = dma.vmem_to_hbm [thread:$0]  %s1446, 512, %s1448, %s1417, 128, 128, 8
        $region76: #{tpu_custom_call.1} parent=43 // pred_fallthru
          _
      $region44: #{tpu_custom_call.1} parent=5 // pred_fallthru
        _
      %p1454 = scmp.le.s32.totalorder 2, %s25
      // Predicated region
      $region77: #{tpu_custom_call.1} parent=5 // pred_check
        %p1455 = pneg %p1454
      $region78: #{tpu_custom_call.1} parent=5 // pred_check_branch
        %1457 = sbr.rel (%p1455) target = $region80
      $region79: #{tpu_custom_call.1} parent=5 // pred_region
        %s1458 = ssub.s32 %s25, 2
        // Predicated region
        $region81: #{tpu_custom_call.1} parent=79 // pred_check
          %p1459 = pneg %p199
        $region82: #{tpu_custom_call.1} parent=79 // pred_check_branch
          %1461 = sbr.rel (%p1459) target = $region84
        $region83: #{tpu_custom_call.1} parent=79 // pred_region
          %s1462 = sand.u32 %s184, 1
          %s1463 = scalar_lea.sflag [#allocation6], %s1462
          %s1464 = sand.u32 %s184, 1
          %s1465 = smul.addr %s1464, 8
          %s1466 = scalar_lea.vmem [#allocation13], %s1465
          %1468 = dma.done %s1463, 128
        $region84: #{tpu_custom_call.1} parent=79 // pred_fallthru
          _
        // Predicated region
        $region85: #{tpu_custom_call.1} parent=79 // pred_check
          %p1469 = pneg %p227
        $region86: #{tpu_custom_call.1} parent=79 // pred_check_branch
          %1471 = sbr.rel (%p1469) target = $region88
        $region87: #{tpu_custom_call.1} parent=79 // pred_region
          %s1472 = sand.u32 %s212, 1
          %s1473 = scalar_lea.sflag [#allocation15], %s1472
          %s1474 = sand.u32 %s212, 1
          %s1475 = smul.addr %s1474, 32
          %s1476 = scalar_lea.vmem [#allocation14], %s1475
          %1478 = dma.done %s1473, 512
        $region88: #{tpu_custom_call.1} parent=79 // pred_fallthru
          _
      $region80: #{tpu_custom_call.1} parent=5 // pred_fallthru
        _
    $region6: #{tpu_custom_call.1} parent=1 // loop_footer
      %s29 = sadd.s32 1, %s25
    $region7: #{tpu_custom_call.1} parent=1 // loop_footer_branch
      %24 = sbr.rel target = $region3
    $region8: #{tpu_custom_call.1} parent=1 // loop_exit
      _
    %1479 = vsyncpa [#allocation5], 1
    %s1480 = scalar_lea.sflag [#allocation5], 1
    %1481 = vsyncpa %s1480, 1
    %1482 = vsyncpa [#allocation8], 1
    %1483 = vsyncpa [#allocation11], 1
    %1484 = vsyncpa [#allocation6], 1
    %s1485 = scalar_lea.sflag [#allocation6], 1
    %1486 = vsyncpa %s1485, 1
    %1487 = vsyncpa [#allocation15], 1
    %s1488 = scalar_lea.sflag [#allocation15], 1
    %1489 = vsyncpa %s1488, 1

</llo_original>
